<compile_context>
chip_gen: v7x
topology: tpu7x:2x2x1
jax: 0.10.0
libtpu: 0.0.40
codegen_flags: <defaults>
</compile_context>

<pallas_src>
import jax
import jax.numpy as jnp
from jax.experimental import pallas as pl
from jax.experimental.pallas import tpu as pltpu


def _cdiv(a, b):
    return (a + b - 1) // b


def _round_up(x, m):
    return _cdiv(x, m) * m


def _vmem_capacity():
    try:
        return int(pltpu.get_tpu_info().vmem_capacity_bytes)
    except Exception:
        return 64 * 1024 * 1024  # conservative default (v7x per-TensorCore)


def _make_tap_kernel(KH, KW, Wp, L):
    """Tap-loop conv + BN bias + ReLU kernel (stride 1, no im2col)."""
    n_taps = KH * KW

    def kernel(w_ref, b_ref, x_ref, o_ref, acc_ref):
        # w_ref:   (KH*KW, TCO, Cin) bf16  conv weight with BN scale folded in
        # b_ref:   (TCO, 1)          f32   folded BN bias
        # x_ref:   (1, Cin, Lin)     bf16  flattened padded image (one batch elt)
        # o_ref:   (1, TCO, L)       bf16  L = Ho*Wp flattened output columns
        # acc_ref: (TCO, L)          f32   accumulator scratch
        for t in range(n_taps):
            kh, kw = divmod(t, KW)
            off = kh * Wp + kw                       # static window offset
            patch = x_ref[0, :, off:off + L]         # (Cin, L) contiguous slice
            contrib = jnp.dot(w_ref[t], patch,
                              preferred_element_type=jnp.float32)
            if t == 0:
                acc_ref[...] = contrib
            else:
                acc_ref[...] += contrib
        y = jnp.maximum(acc_ref[...] + b_ref[...], 0.0)
        o_ref[0] = y.astype(o_ref.dtype)

    return kernel


def _gemm_kernel(w_ref, b_ref, p_ref, o_ref):
    """im2col GEMM + BN bias + ReLU kernel (fallback path)."""
    acc = jnp.dot(w_ref[...], p_ref[...], preferred_element_type=jnp.float32)
    o_ref[...] = jnp.maximum(acc + b_ref[...], 0.0).astype(o_ref.dtype)


def basic_conv2d(x_nchw, weight_oihw, gamma, beta, running_mean, running_var,
                 *, stride=1, padding=0, eps=1e-3, out_dtype=jnp.bfloat16):
    """Conv2d(bias=False) -> BatchNorm2d(eval) -> ReLU.  NCHW in, NCHW out (bf16)."""
    N, Cin, H, W = x_nchw.shape
    Cout, Cin_w, KH, KW = weight_oihw.shape
    assert Cin == Cin_w

    Hp, Wp = H + 2 * padding, W + 2 * padding
    Ho = (Hp - KH) // stride + 1
    Wo = (Wp - KW) // stride + 1

    # Fold eval-mode BN into the conv: scale into the (bf16) weights, shift into
    # a per-channel bias applied in the f32 epilogue.
    scale = (gamma / jnp.sqrt(running_var + eps)).astype(jnp.float32)          # (Cout,)
    bias = (beta.astype(jnp.float32)
            - running_mean.astype(jnp.float32) * scale).reshape(Cout, 1)        # (Cout,1)
    w_scaled = weight_oihw.astype(jnp.float32) * scale[:, None, None, None]     # OIHW f32

    out_bytes = jnp.dtype(out_dtype).itemsize
    vmem_cap = _vmem_capacity()
    vmem_budget = vmem_cap // 3                      # headroom for compiler temps
    vmem_limit = int(min(vmem_cap * 3 // 4, 96 * 1024 * 1024))

    x_bf = x_nchw.astype(jnp.bfloat16)               # cast before any padding/slicing

    # ------------------------------------------------------------------ tap path
    use_tap_path = (stride == 1)
    tco = None
    if use_tap_path:
        L = Ho * Wp                                  # output cols incl. KW-1 junk/row
        Lin = Hp * Wp + (KW - 1)                     # flat image + tail for last tap

        def step_bytes(c):                           # per-grid-step VMEM footprint
            x_blk = Cin * Lin * 2
            w_blk = KH * KW * c * Cin * 2
            o_blk = c * L * out_bytes
            acc = c * L * 4
            return 2 * (x_blk + w_blk + o_blk + c * 4) + acc

        cands = sorted({c for c in range(16, Cout, 16) if Cout % c == 0} | {Cout},
                       reverse=True)
        for c in cands:                              # largest Cout tile that fits VMEM
            if step_bytes(c) <= vmem_budget:
                tco = c
                break
        if tco is not None and N * (Cout // tco) < 2:
            for c in cands:                          # give v7x's 2nd core work at N=1
                if c < tco and step_bytes(c) <= vmem_budget:
                    tco = c
                    break
        use_tap_path = tco is not None

    if use_tap_path:
        x_pad = jnp.pad(x_bf, ((0, 0), (0, 0),
                               (padding, padding), (padding, padding)))
        x_flat = x_pad.reshape(N, Cin, Hp * Wp)
        if KW > 1:
            x_flat = jnp.pad(x_flat, ((0, 0), (0, 0), (0, KW - 1)))

        # (KH*KW, Cout, Cin) bf16, tap-major, BN scale folded in.
        w_taps = jnp.transpose(w_scaled, (2, 3, 0, 1)).reshape(KH * KW, Cout, Cin)
        w_taps = w_taps.astype(jnp.bfloat16)

        n_co = Cout // tco
        cost = pl.CostEstimate(
            flops=2 * N * Cout * Cin * KH * KW * Ho * Wo,
            transcendentals=0,
            bytes_accessed=(N * Cin * Lin * 2 + KH * KW * Cout * Cin * 2
                            + Cout * 4 + N * Cout * L * out_bytes))

        out = pl.pallas_call(
            _make_tap_kernel(KH, KW, Wp, L),
            out_shape=jax.ShapeDtypeStruct((N, Cout, L), out_dtype),
            grid_spec=pltpu.PrefetchScalarGridSpec(
                num_scalar_prefetch=0,
                grid=(N, n_co),
                in_specs=[
                    pl.BlockSpec((KH * KW, tco, Cin), lambda n, c: (0, c, 0)),
                    pl.BlockSpec((tco, 1), lambda n, c: (c, 0)),
                    pl.BlockSpec((1, Cin, Lin), lambda n, c: (n, 0, 0)),
                ],
                out_specs=pl.BlockSpec((1, tco, L), lambda n, c: (n, c, 0)),
                scratch_shapes=[pltpu.VMEM((tco, L), jnp.float32)],
            ),
            compiler_params=pltpu.CompilerParams(
                dimension_semantics=("parallel", "parallel"),
                vmem_limit_bytes=vmem_limit),
            cost_estimate=cost,
        )(w_taps, bias, x_flat)

        # Drop the KW-1 junk columns per output row (reshape is metadata only).
        return out.reshape(N, Cout, Ho, Wp)[:, :, :, :Wo]

    # --------------------------------------------------------------- GEMM fallback
    # TODO(synk): a phase-split (space-to-depth) tap path for stride > 1 would
    # remove the KH*KW im2col expansion here as well.
    x_pad = jnp.pad(x_bf, ((0, 0), (0, 0), (padding, padding), (padding, padding)))
    slabs = []
    for kh in range(KH):
        for kw in range(KW):
            h_end = kh + (Ho - 1) * stride + 1
            w_end = kw + (Wo - 1) * stride + 1
            slabs.append(x_pad[:, :, kh:h_end:stride, kw:w_end:stride])  # (N,Cin,Ho,Wo)
    K = KH * KW * Cin
    ncols = N * Ho * Wo                               # batch folded into columns
    cols = jnp.stack(slabs, axis=0)                   # (T, N, Cin, Ho, Wo) bf16
    cols = jnp.transpose(cols, (0, 2, 1, 3, 4)).reshape(K, ncols)

    w_flat = jnp.transpose(w_scaled, (0, 2, 3, 1)).reshape(Cout, K).astype(jnp.bfloat16)

    def gemm_step_bytes(t):
        return 2 * (K * t * 2 + Cout * t * out_bytes + Cout * K * 2 + Cout * 4)

    n_try = 1                                         # balanced column tiles
    while True:
        tile_cols = min(_round_up(_cdiv(ncols, n_try), 128), _round_up(ncols, 128))
        if gemm_step_bytes(tile_cols) <= vmem_budget or tile_cols == 128:
            break
        n_try += 1
    if gemm_step_bytes(tile_cols) > vmem_budget:
        raise ValueError("BasicConv2d: contraction too large for a 128-column VMEM tile")
    n_tiles = _cdiv(ncols, tile_cols)
    if n_tiles < 2 and tile_cols > 128:               # keep both v7x cores busy
        tile_cols = _round_up(_cdiv(ncols, 2), 128)
        n_tiles = _cdiv(ncols, tile_cols)
    ncols_pad = n_tiles * tile_cols
    cols = jnp.pad(cols, ((0, 0), (0, ncols_pad - ncols)))

    cost = pl.CostEstimate(
        flops=2 * Cout * K * ncols,
        transcendentals=0,
        bytes_accessed=(K * ncols_pad * 2 + Cout * K * 2 + Cout * 4
                        + Cout * ncols_pad * out_bytes))

    out = pl.pallas_call(
        _gemm_kernel,
        out_shape=jax.ShapeDtypeStruct((Cout, ncols_pad), out_dtype),
        grid_spec=pltpu.PrefetchScalarGridSpec(
            num_scalar_prefetch=0,
            grid=(n_tiles,),
            in_specs=[
                pl.BlockSpec((Cout, K), lambda j: (0, 0)),
                pl.BlockSpec((Cout, 1), lambda j: (0, 0)),
                pl.BlockSpec((K, tile_cols), lambda j: (0, j)),
            ],
            out_specs=pl.BlockSpec((Cout, tile_cols), lambda j: (0, j)),
        ),
        compiler_params=pltpu.CompilerParams(
            dimension_semantics=("parallel",),
            vmem_limit_bytes=vmem_limit),
        cost_estimate=cost,
    )(w_flat, bias, cols)

    out = out[:, :ncols].reshape(Cout, N, Ho, Wo)
    return jnp.transpose(out, (1, 0, 2, 3))


def _reference(x_f32, w_f32, bias, *, stride, padding):
    y = jax.lax.conv_general_dilated(
        x_f32, w_f32, window_strides=(stride, stride),
        padding=[(padding, padding), (padding, padding)],
        dimension_numbers=("NCHW", "OIHW", "NCHW"))
    return jnp.maximum(y + bias.reshape(1, -1, 1, 1), 0.0)


if __name__ == "__main__":
    # Module config: BasicConv2d(in_planes=4, out_planes=8, kernel_size=3,
    #                            stride=1, padding=1)
    in_planes, out_planes, ksize, stride, padding = 4, 8, 3, 1, 1
    N, H, W = 2, 16, 16
    eps = 1e-3

    key = jax.random.PRNGKey(0)
    kx, kwt, kg, kb, km, kv = jax.random.split(key, 6)

    x = jax.random.normal(kx, (N, in_planes, H, W), dtype=jnp.float32)
    weight = 0.1 * jax.random.normal(kwt, (out_planes, in_planes, ksize, ksize),
                                     dtype=jnp.float32)             # Conv2d.weight (OIHW)
    gamma = 1.0 + 0.1 * jax.random.normal(kg, (out_planes,), dtype=jnp.float32)
    beta = 0.1 * jax.random.normal(kb, (out_planes,), dtype=jnp.float32)
    running_mean = 0.1 * jax.random.normal(km, (out_planes,), dtype=jnp.float32)
    running_var = jnp.abs(jax.random.normal(kv, (out_planes,), dtype=jnp.float32)) + 0.5

    out = basic_conv2d(x, weight, gamma, beta, running_mean, running_var,
                       stride=stride, padding=padding, eps=eps)
    out = jax.block_until_ready(out)

    # Reference with matching numerics: BN scale folded into the weights,
    # bf16-rounded conv operands, f32 accumulation, bias + ReLU, bf16 store.
    scale = gamma / jnp.sqrt(running_var + eps)
    bias = beta - running_mean * scale
    w_fold = (weight * scale[:, None, None, None]).astype(jnp.bfloat16).astype(jnp.float32)
    x_bf = x.astype(jnp.bfloat16).astype(jnp.float32)
    ref = _reference(x_bf, w_fold, bias, stride=stride, padding=padding)
    ref = ref.astype(jnp.bfloat16).astype(jnp.float32)

    assert out.shape == (N, out_planes, H, W)
    assert out.dtype == jnp.bfloat16
    assert jnp.allclose(out.astype(jnp.float32), ref, atol=2e-2, rtol=2e-2), \
        "mismatch vs reference"

    print("KERNEL_OK")
</pallas_src>

<mosaic_0001>
module attributes {stable_mosaic.version = 11 : i64} {
  func.func @kernel(%arg0: i32, %arg1: i32, %arg2: memref<9x8x4xbf16, #tpu.memory_space<vmem>>, %arg3: memref<8x1xf32, #tpu.memory_space<vmem>>, %arg4: memref<1x4x326xbf16, #tpu.memory_space<vmem>>, %arg5: memref<1x8x288xbf16, #tpu.memory_space<vmem>>, %arg6: memref<8x288xf32, #tpu.memory_space<vmem>>) attributes {dimension_semantics = [#tpu.dimension_semantics<parallel>, #tpu.dimension_semantics<parallel>], iteration_bounds = array<i64: 2, 1>, scalar_prefetch = 0 : i64, scratch_operands = 1 : i64, tpu.core_type = #tpu.core_type<tc>, window_params = [{transform_indices = @transform_0, window_bounds = array<i64: 9, 8, 4>}, {transform_indices = @transform_1, window_bounds = array<i64: 8, 1>}, {transform_indices = @transform_2, window_bounds = array<i64: 1, 4, 326>}, {transform_indices = @transform_3, window_bounds = array<i64: 1, 8, 288>}]} {
    %c0 = arith.constant 0 : index
    %c0_0 = arith.constant 0 : index
    %c0_1 = arith.constant 0 : index
    %0 = vector.load %arg4[%c0, %c0_0, %c0_1] : memref<1x4x326xbf16, #tpu.memory_space<vmem>>, vector<1x4x288xbf16>
    %1 = vector.shape_cast %0 : vector<1x4x288xbf16> to vector<4x288xbf16>
    %c0_2 = arith.constant 0 : index
    %c0_3 = arith.constant 0 : index
    %c0_4 = arith.constant 0 : index
    %2 = vector.load %arg2[%c0_2, %c0_3, %c0_4] : memref<9x8x4xbf16, #tpu.memory_space<vmem>>, vector<1x8x4xbf16>
    %3 = vector.shape_cast %2 : vector<1x8x4xbf16> to vector<8x4xbf16>
    %cst = arith.constant dense<0.000000e+00> : vector<8x288xf32>
    %4 = tpu.matmul %3, %1, %cst {dimension_numbers = #tpu.dot_dimension_numbers<[1], [0], [0], [1], [0, 0, 1, 1], [], []>} : vector<8x4xbf16>, vector<4x288xbf16>, vector<8x288xf32> -> vector<8x288xf32>
    %c0_5 = arith.constant 0 : index
    %c0_6 = arith.constant 0 : index
    %5 = vector.load %arg6[%c0_5, %c0_6] : memref<8x288xf32, #tpu.memory_space<vmem>>, vector<8x288xf32>
    tpu.vector_store %arg6[%c0_5, %c0_6], %4 {strides = array<i32>} : memref<8x288xf32, #tpu.memory_space<vmem>>, vector<8x288xf32>,
    %c0_7 = arith.constant 0 : index
    %c0_8 = arith.constant 0 : index
    %c1 = arith.constant 1 : index
    %6 = vector.load %arg4[%c0_7, %c0_8, %c1] : memref<1x4x326xbf16, #tpu.memory_space<vmem>>, vector<1x4x288xbf16>
    %7 = vector.shape_cast %6 : vector<1x4x288xbf16> to vector<4x288xbf16>
    %c1_9 = arith.constant 1 : index
    %c0_10 = arith.constant 0 : index
    %c0_11 = arith.constant 0 : index
    %8 = vector.load %arg2[%c1_9, %c0_10, %c0_11] : memref<9x8x4xbf16, #tpu.memory_space<vmem>>, vector<1x8x4xbf16>
    %9 = vector.shape_cast %8 : vector<1x8x4xbf16> to vector<8x4xbf16>
    %cst_12 = arith.constant dense<0.000000e+00> : vector<8x288xf32>
    %10 = tpu.matmul %9, %7, %cst_12 {dimension_numbers = #tpu.dot_dimension_numbers<[1], [0], [0], [1], [0, 0, 1, 1], [], []>} : vector<8x4xbf16>, vector<4x288xbf16>, vector<8x288xf32> -> vector<8x288xf32>
    %c0_13 = arith.constant 0 : index
    %c0_14 = arith.constant 0 : index
    %11 = vector.load %arg6[%c0_13, %c0_14] : memref<8x288xf32, #tpu.memory_space<vmem>>, vector<8x288xf32>
    %12 = arith.addf %11, %10 : vector<8x288xf32>
    %c0_15 = arith.constant 0 : index
    %c0_16 = arith.constant 0 : index
    %13 = vector.load %arg6[%c0_15, %c0_16] : memref<8x288xf32, #tpu.memory_space<vmem>>, vector<8x288xf32>
    tpu.vector_store %arg6[%c0_15, %c0_16], %12 {strides = array<i32>} : memref<8x288xf32, #tpu.memory_space<vmem>>, vector<8x288xf32>,
    %c0_17 = arith.constant 0 : index
    %c0_18 = arith.constant 0 : index
    %c2 = arith.constant 2 : index
    %14 = vector.load %arg4[%c0_17, %c0_18, %c2] : memref<1x4x326xbf16, #tpu.memory_space<vmem>>, vector<1x4x288xbf16>
    %15 = vector.shape_cast %14 : vector<1x4x288xbf16> to vector<4x288xbf16>
    %c2_19 = arith.constant 2 : index
    %c0_20 = arith.constant 0 : index
    %c0_21 = arith.constant 0 : index
    %16 = vector.load %arg2[%c2_19, %c0_20, %c0_21] : memref<9x8x4xbf16, #tpu.memory_space<vmem>>, vector<1x8x4xbf16>
    %17 = vector.shape_cast %16 : vector<1x8x4xbf16> to vector<8x4xbf16>
    %cst_22 = arith.constant dense<0.000000e+00> : vector<8x288xf32>
    %18 = tpu.matmul %17, %15, %cst_22 {dimension_numbers = #tpu.dot_dimension_numbers<[1], [0], [0], [1], [0, 0, 1, 1], [], []>} : vector<8x4xbf16>, vector<4x288xbf16>, vector<8x288xf32> -> vector<8x288xf32>
    %c0_23 = arith.constant 0 : index
    %c0_24 = arith.constant 0 : index
    %19 = vector.load %arg6[%c0_23, %c0_24] : memref<8x288xf32, #tpu.memory_space<vmem>>, vector<8x288xf32>
    %20 = arith.addf %19, %18 : vector<8x288xf32>
    %c0_25 = arith.constant 0 : index
    %c0_26 = arith.constant 0 : index
    %21 = vector.load %arg6[%c0_25, %c0_26] : memref<8x288xf32, #tpu.memory_space<vmem>>, vector<8x288xf32>
    tpu.vector_store %arg6[%c0_25, %c0_26], %20 {strides = array<i32>} : memref<8x288xf32, #tpu.memory_space<vmem>>, vector<8x288xf32>,
    %c0_27 = arith.constant 0 : index
    %c0_28 = arith.constant 0 : index
    %c18 = arith.constant 18 : index
    %22 = vector.load %arg4[%c0_27, %c0_28, %c18] : memref<1x4x326xbf16, #tpu.memory_space<vmem>>, vector<1x4x288xbf16>
    %23 = vector.shape_cast %22 : vector<1x4x288xbf16> to vector<4x288xbf16>
    %c3 = arith.constant 3 : index
    %c0_29 = arith.constant 0 : index
    %c0_30 = arith.constant 0 : index
    %24 = vector.load %arg2[%c3, %c0_29, %c0_30] : memref<9x8x4xbf16, #tpu.memory_space<vmem>>, vector<1x8x4xbf16>
    %25 = vector.shape_cast %24 : vector<1x8x4xbf16> to vector<8x4xbf16>
    %cst_31 = arith.constant dense<0.000000e+00> : vector<8x288xf32>
    %26 = tpu.matmul %25, %23, %cst_31 {dimension_numbers = #tpu.dot_dimension_numbers<[1], [0], [0], [1], [0, 0, 1, 1], [], []>} : vector<8x4xbf16>, vector<4x288xbf16>, vector<8x288xf32> -> vector<8x288xf32>
    %c0_32 = arith.constant 0 : index
    %c0_33 = arith.constant 0 : index
    %27 = vector.load %arg6[%c0_32, %c0_33] : memref<8x288xf32, #tpu.memory_space<vmem>>, vector<8x288xf32>
    %28 = arith.addf %27, %26 : vector<8x288xf32>
    %c0_34 = arith.constant 0 : index
    %c0_35 = arith.constant 0 : index
    %29 = vector.load %arg6[%c0_34, %c0_35] : memref<8x288xf32, #tpu.memory_space<vmem>>, vector<8x288xf32>
    tpu.vector_store %arg6[%c0_34, %c0_35], %28 {strides = array<i32>} : memref<8x288xf32, #tpu.memory_space<vmem>>, vector<8x288xf32>,
    %c0_36 = arith.constant 0 : index
    %c0_37 = arith.constant 0 : index
    %c19 = arith.constant 19 : index
    %30 = vector.load %arg4[%c0_36, %c0_37, %c19] : memref<1x4x326xbf16, #tpu.memory_space<vmem>>, vector<1x4x288xbf16>
    %31 = vector.shape_cast %30 : vector<1x4x288xbf16> to vector<4x288xbf16>
    %c4 = arith.constant 4 : index
    %c0_38 = arith.constant 0 : index
    %c0_39 = arith.constant 0 : index
    %32 = vector.load %arg2[%c4, %c0_38, %c0_39] : memref<9x8x4xbf16, #tpu.memory_space<vmem>>, vector<1x8x4xbf16>
    %33 = vector.shape_cast %32 : vector<1x8x4xbf16> to vector<8x4xbf16>
    %cst_40 = arith.constant dense<0.000000e+00> : vector<8x288xf32>
    %34 = tpu.matmul %33, %31, %cst_40 {dimension_numbers = #tpu.dot_dimension_numbers<[1], [0], [0], [1], [0, 0, 1, 1], [], []>} : vector<8x4xbf16>, vector<4x288xbf16>, vector<8x288xf32> -> vector<8x288xf32>
    %c0_41 = arith.constant 0 : index
    %c0_42 = arith.constant 0 : index
    %35 = vector.load %arg6[%c0_41, %c0_42] : memref<8x288xf32, #tpu.memory_space<vmem>>, vector<8x288xf32>
    %36 = arith.addf %35, %34 : vector<8x288xf32>
    %c0_43 = arith.constant 0 : index
    %c0_44 = arith.constant 0 : index
    %37 = vector.load %arg6[%c0_43, %c0_44] : memref<8x288xf32, #tpu.memory_space<vmem>>, vector<8x288xf32>
    tpu.vector_store %arg6[%c0_43, %c0_44], %36 {strides = array<i32>} : memref<8x288xf32, #tpu.memory_space<vmem>>, vector<8x288xf32>,
    %c0_45 = arith.constant 0 : index
    %c0_46 = arith.constant 0 : index
    %c20 = arith.constant 20 : index
    %38 = vector.load %arg4[%c0_45, %c0_46, %c20] : memref<1x4x326xbf16, #tpu.memory_space<vmem>>, vector<1x4x288xbf16>
    %39 = vector.shape_cast %38 : vector<1x4x288xbf16> to vector<4x288xbf16>
    %c5 = arith.constant 5 : index
    %c0_47 = arith.constant 0 : index
    %c0_48 = arith.constant 0 : index
    %40 = vector.load %arg2[%c5, %c0_47, %c0_48] : memref<9x8x4xbf16, #tpu.memory_space<vmem>>, vector<1x8x4xbf16>
    %41 = vector.shape_cast %40 : vector<1x8x4xbf16> to vector<8x4xbf16>
    %cst_49 = arith.constant dense<0.000000e+00> : vector<8x288xf32>
    %42 = tpu.matmul %41, %39, %cst_49 {dimension_numbers = #tpu.dot_dimension_numbers<[1], [0], [0], [1], [0, 0, 1, 1], [], []>} : vector<8x4xbf16>, vector<4x288xbf16>, vector<8x288xf32> -> vector<8x288xf32>
    %c0_50 = arith.constant 0 : index
    %c0_51 = arith.constant 0 : index
    %43 = vector.load %arg6[%c0_50, %c0_51] : memref<8x288xf32, #tpu.memory_space<vmem>>, vector<8x288xf32>
    %44 = arith.addf %43, %42 : vector<8x288xf32>
    %c0_52 = arith.constant 0 : index
    %c0_53 = arith.constant 0 : index
    %45 = vector.load %arg6[%c0_52, %c0_53] : memref<8x288xf32, #tpu.memory_space<vmem>>, vector<8x288xf32>
    tpu.vector_store %arg6[%c0_52, %c0_53], %44 {strides = array<i32>} : memref<8x288xf32, #tpu.memory_space<vmem>>, vector<8x288xf32>,
    %c0_54 = arith.constant 0 : index
    %c0_55 = arith.constant 0 : index
    %c36 = arith.constant 36 : index
    %46 = vector.load %arg4[%c0_54, %c0_55, %c36] : memref<1x4x326xbf16, #tpu.memory_space<vmem>>, vector<1x4x288xbf16>
    %47 = vector.shape_cast %46 : vector<1x4x288xbf16> to vector<4x288xbf16>
    %c6 = arith.constant 6 : index
    %c0_56 = arith.constant 0 : index
    %c0_57 = arith.constant 0 : index
    %48 = vector.load %arg2[%c6, %c0_56, %c0_57] : memref<9x8x4xbf16, #tpu.memory_space<vmem>>, vector<1x8x4xbf16>
    %49 = vector.shape_cast %48 : vector<1x8x4xbf16> to vector<8x4xbf16>
    %cst_58 = arith.constant dense<0.000000e+00> : vector<8x288xf32>
    %50 = tpu.matmul %49, %47, %cst_58 {dimension_numbers = #tpu.dot_dimension_numbers<[1], [0], [0], [1], [0, 0, 1, 1], [], []>} : vector<8x4xbf16>, vector<4x288xbf16>, vector<8x288xf32> -> vector<8x288xf32>
    %c0_59 = arith.constant 0 : index
    %c0_60 = arith.constant 0 : index
    %51 = vector.load %arg6[%c0_59, %c0_60] : memref<8x288xf32, #tpu.memory_space<vmem>>, vector<8x288xf32>
    %52 = arith.addf %51, %50 : vector<8x288xf32>
    %c0_61 = arith.constant 0 : index
    %c0_62 = arith.constant 0 : index
    %53 = vector.load %arg6[%c0_61, %c0_62] : memref<8x288xf32, #tpu.memory_space<vmem>>, vector<8x288xf32>
    tpu.vector_store %arg6[%c0_61, %c0_62], %52 {strides = array<i32>} : memref<8x288xf32, #tpu.memory_space<vmem>>, vector<8x288xf32>,
    %c0_63 = arith.constant 0 : index
    %c0_64 = arith.constant 0 : index
    %c37 = arith.constant 37 : index
    %54 = vector.load %arg4[%c0_63, %c0_64, %c37] : memref<1x4x326xbf16, #tpu.memory_space<vmem>>, vector<1x4x288xbf16>
    %55 = vector.shape_cast %54 : vector<1x4x288xbf16> to vector<4x288xbf16>
    %c7 = arith.constant 7 : index
    %c0_65 = arith.constant 0 : index
    %c0_66 = arith.constant 0 : index
    %56 = vector.load %arg2[%c7, %c0_65, %c0_66] : memref<9x8x4xbf16, #tpu.memory_space<vmem>>, vector<1x8x4xbf16>
    %57 = vector.shape_cast %56 : vector<1x8x4xbf16> to vector<8x4xbf16>
    %cst_67 = arith.constant dense<0.000000e+00> : vector<8x288xf32>
    %58 = tpu.matmul %57, %55, %cst_67 {dimension_numbers = #tpu.dot_dimension_numbers<[1], [0], [0], [1], [0, 0, 1, 1], [], []>} : vector<8x4xbf16>, vector<4x288xbf16>, vector<8x288xf32> -> vector<8x288xf32>
    %c0_68 = arith.constant 0 : index
    %c0_69 = arith.constant 0 : index
    %59 = vector.load %arg6[%c0_68, %c0_69] : memref<8x288xf32, #tpu.memory_space<vmem>>, vector<8x288xf32>
    %60 = arith.addf %59, %58 : vector<8x288xf32>
    %c0_70 = arith.constant 0 : index
    %c0_71 = arith.constant 0 : index
    %61 = vector.load %arg6[%c0_70, %c0_71] : memref<8x288xf32, #tpu.memory_space<vmem>>, vector<8x288xf32>
    tpu.vector_store %arg6[%c0_70, %c0_71], %60 {strides = array<i32>} : memref<8x288xf32, #tpu.memory_space<vmem>>, vector<8x288xf32>,
    %c0_72 = arith.constant 0 : index
    %c0_73 = arith.constant 0 : index
    %c38 = arith.constant 38 : index
    %62 = vector.load %arg4[%c0_72, %c0_73, %c38] : memref<1x4x326xbf16, #tpu.memory_space<vmem>>, vector<1x4x288xbf16>
    %63 = vector.shape_cast %62 : vector<1x4x288xbf16> to vector<4x288xbf16>
    %c8 = arith.constant 8 : index
    %c0_74 = arith.constant 0 : index
    %c0_75 = arith.constant 0 : index
    %64 = vector.load %arg2[%c8, %c0_74, %c0_75] : memref<9x8x4xbf16, #tpu.memory_space<vmem>>, vector<1x8x4xbf16>
    %65 = vector.shape_cast %64 : vector<1x8x4xbf16> to vector<8x4xbf16>
    %cst_76 = arith.constant dense<0.000000e+00> : vector<8x288xf32>
    %66 = tpu.matmul %65, %63, %cst_76 {dimension_numbers = #tpu.dot_dimension_numbers<[1], [0], [0], [1], [0, 0, 1, 1], [], []>} : vector<8x4xbf16>, vector<4x288xbf16>, vector<8x288xf32> -> vector<8x288xf32>
    %c0_77 = arith.constant 0 : index
    %c0_78 = arith.constant 0 : index
    %67 = vector.load %arg6[%c0_77, %c0_78] : memref<8x288xf32, #tpu.memory_space<vmem>>, vector<8x288xf32>
    %68 = arith.addf %67, %66 : vector<8x288xf32>
    %c0_79 = arith.constant 0 : index
    %c0_80 = arith.constant 0 : index
    %69 = vector.load %arg6[%c0_79, %c0_80] : memref<8x288xf32, #tpu.memory_space<vmem>>, vector<8x288xf32>
    tpu.vector_store %arg6[%c0_79, %c0_80], %68 {strides = array<i32>} : memref<8x288xf32, #tpu.memory_space<vmem>>, vector<8x288xf32>,
    %c0_81 = arith.constant 0 : index
    %c0_82 = arith.constant 0 : index
    %70 = vector.load %arg6[%c0_81, %c0_82] : memref<8x288xf32, #tpu.memory_space<vmem>>, vector<8x288xf32>
    %c0_83 = arith.constant 0 : index
    %c0_84 = arith.constant 0 : index
    %71 = vector.load %arg3[%c0_83, %c0_84] : memref<8x1xf32, #tpu.memory_space<vmem>>, vector<8x1xf32>
    %72 = vector.broadcast %71 : vector<8x1xf32> to vector<8x288xf32>
    %73 = arith.addf %70, %72 : vector<8x288xf32>
    %cst_85 = arith.constant 0.000000e+00 : f32
    %74 = vector.broadcast %cst_85 : f32 to vector<8x288xf32>
    %75 = arith.maximumf %73, %74 : vector<8x288xf32>
    %76 = arith.truncf %75 : vector<8x288xf32> to vector<8x288xbf16>
    %c0_86 = arith.constant 0 : index
    %c0_87 = arith.constant 0 : index
    %c0_88 = arith.constant 0 : index
    %77 = vector.load %arg5[%c0_86, %c0_87, %c0_88] : memref<1x8x288xbf16, #tpu.memory_space<vmem>>, vector<1x8x288xbf16>
    %78 = vector.shape_cast %77 : vector<1x8x288xbf16> to vector<8x288xbf16>
    %79 = vector.shape_cast %76 : vector<8x288xbf16> to vector<1x8x288xbf16>
    tpu.vector_store %arg5[%c0_86, %c0_87, %c0_88], %79 {strides = array<i32>} : memref<1x8x288xbf16, #tpu.memory_space<vmem>>, vector<1x8x288xbf16>,
    return
  }
  func.func @transform_0(%arg0: i32, %arg1: i32) -> (i32, i32, i32) {
    %c0_i32 = arith.constant 0 : i32
    %c0_i32_0 = arith.constant 0 : i32
    %c0_i32_1 = arith.constant 0 : i32
    return %c0_i32, %arg1, %c0_i32_0 : i32, i32, i32
  }
  func.func @transform_1(%arg0: i32, %arg1: i32) -> (i32, i32) {
    %c0_i32 = arith.constant 0 : i32
    %c0_i32_0 = arith.constant 0 : i32
    return %arg1, %c0_i32 : i32, i32
  }
  func.func @transform_2(%arg0: i32, %arg1: i32) -> (i32, i32, i32) {
    %c0_i32 = arith.constant 0 : i32
    %c0_i32_0 = arith.constant 0 : i32
    %c0_i32_1 = arith.constant 0 : i32
    return %arg0, %c0_i32, %c0_i32_0 : i32, i32, i32
  }
  func.func @transform_3(%arg0: i32, %arg1: i32) -> (i32, i32, i32) {
    %c0_i32 = arith.constant 0 : i32
    %c0_i32_0 = arith.constant 0 : i32
    return %arg0, %arg1, %c0_i32 : i32, i32, i32
  }
}

</mosaic_0001>

<llo_original>
// kernel: tpu_custom_call.1
$region0: #{tpu_custom_call.1}
  #allocation0 [shape = 'u32[]', space=smem, size = 0x4, offset = 0x4, fixed_abs, tag = 'smem constant byte address 0x4 - core index']
  #allocation1 [shape = 'u32[144,128]{1,0:T(1,128)}', space=vmem, size = 0x12000, scoped, tag = 'internal scratch']
  #allocation2 [shape = 'f32[8,288]{1,0:T(8,128)}', space=vmem, size = 0x3000, scoped, tag = 'scratch operand']
  %s0 = inlined_call_operand.vmem [shape: bf16[9,8,4], index: 0, kind: input, shape index: {}]
  %s1 = inlined_call_operand.vmem [shape: f32[8,1], index: 1, kind: input, shape index: {}]
  %s2 = inlined_call_operand.vmem [shape: bf16[2,4,326], index: 2, kind: input, shape index: {}]
  %s3 = inlined_call_operand.hbm [shape: bf16[2,8,288], index: 3, kind: output, shape index: {}]
  %s4 = sld [smem:[#allocation0]]
  $region45: #{tpu_custom_call.1} parent=0
    _
  %s6 = ssub.s32 1, %s4
  %s7 = scalar_select 0, %s6, %s4
  $region1: #{tpu_custom_call.1} parent=0
    #allocation3 [shape = 'u8[12288]{0}', space=vmem, size = 0x3000, scoped, tag = 'output window, operand 0']
    #allocation4 [shape = 's32[2]{0}', space=sflag, size = 0x8, scoped, tag = 'scoped memory for tpu_custom_call.1']
    %8 = vsyncpa [#allocation4], 0
    %s9 = scalar_lea.sflag [#allocation4], 1
    %10 = vsyncpa %s9, 0
    loop: start=0, step=1, limit=4
    $region2: #{tpu_custom_call.1} parent=1 // loop_pre_header
      _
    $region3: #{tpu_custom_call.1} parent=1 // loop_header
      %s12 = sphi 0, %s16
      %p13 = scmp.ge.s32.totalorder %s12, 4
      %s19 = sphi 0, %s31
      %s20 = sphi 0, %s27
      %s21 = sphi 0, %s19
      %s22 = sphi 0, %s20
      %s23 = sphi 0, %s21
      %s24 = sphi 0, %s22
      %s34 = sphi 0, %s36
      %s37 = sphi 0, %s34
      %s38 = sphi 0, %s37
      %s54 = sphi 0, %s38
      %s60 = sphi 0, %s62
      %s63 = sphi 0, %s60
      %s64 = sphi 0, %s63
      %s80 = sphi 0, %s64
      %s86 = sphi 0, %s88
      %s89 = sphi 0, %s86
      %s90 = sphi 0, %s89
      %s106 = sphi 0, %s90
      %s114 = sphi 0, %s116
      %s117 = sphi 0, %s114
      %s118 = sphi 0, %s117
      %s134 = sphi 0, %s118
    $region4: #{tpu_custom_call.1} parent=1 // loop_header_branch
      %15 = sbr.rel (%p13) target = $region8
    $region5: #{tpu_custom_call.1} parent=1 // loop_body
      %s17 = ssub.s32 %s12, 1
      %s18 = ssub.s32 %s12, 2
      %s25 = sadd.s32 1, %s20
      %p26 = scmp.ge.s32.totalorder %s25, 1
      %s27 = scalar_select %p26, 0, %s25
      %s28 = sadd.s32 1, %s19
      %s29 = scalar_select %p26, %s28, %s19
      %p30 = scmp.ge.s32.totalorder %s29, 2
      %s31 = scalar_select %p30, 0, %s29
      %s32 = ssub.s32 %s20, %s27
      %p33 = scmp.eq.s32.totalorder %s32, 0
      %s35 = sadd.s32 %s34, 1
      %s36 = scalar_select %p33, %s34, %s35
      %p39 = pneg %p33
      %p40 = scmp.eq.s32.totalorder %s12, 1
      %p41 = por %p39, %p40
      %p42 = scmp.ne.s32.totalorder %s34, %s37
      %p43 = scmp.eq.s32.totalorder %s12, 0
      %p44 = por %p42, %p43
      %p45 = scmp.ne.s32.totalorder %s34, %s37
      %p46 = scmp.eq.s32.totalorder %s17, 1
      %p47 = por %p45, %p46
      %p48 = scmp.ne.s32.totalorder %s37, %s38
      %p49 = scmp.eq.s32.totalorder %s17, 0
      %p50 = por %p48, %p49
      %p51 = scmp.ne.s32.totalorder %s37, %s38
      %p52 = scmp.eq.s32.totalorder %s18, 1
      %p53 = por %p51, %p52
      %p55 = scmp.ne.s32.totalorder %s38, %s54
      %p56 = scmp.eq.s32.totalorder %s18, 0
      %p57 = por %p55, %p56
      %s58 = ssub.s32 %s20, %s27
      %p59 = scmp.eq.s32.totalorder %s58, 0
      %s61 = sadd.s32 %s60, 1
      %s62 = scalar_select %p59, %s60, %s61
      %p65 = pneg %p59
      %p66 = scmp.eq.s32.totalorder %s12, 1
      %p67 = por %p65, %p66
      %p68 = scmp.ne.s32.totalorder %s60, %s63
      %p69 = scmp.eq.s32.totalorder %s12, 0
      %p70 = por %p68, %p69
      %p71 = scmp.ne.s32.totalorder %s60, %s63
      %p72 = scmp.eq.s32.totalorder %s17, 1
      %p73 = por %p71, %p72
      %p74 = scmp.ne.s32.totalorder %s63, %s64
      %p75 = scmp.eq.s32.totalorder %s17, 0
      %p76 = por %p74, %p75
      %p77 = scmp.ne.s32.totalorder %s63, %s64
      %p78 = scmp.eq.s32.totalorder %s18, 1
      %p79 = por %p77, %p78
      %p81 = scmp.ne.s32.totalorder %s64, %s80
      %p82 = scmp.eq.s32.totalorder %s18, 0
      %p83 = por %p81, %p82
      %s84 = ssub.s32 %s19, %s31
      %p85 = scmp.eq.s32.totalorder %s84, 0
      %s87 = sadd.s32 %s86, 1
      %s88 = scalar_select %p85, %s86, %s87
      %p91 = pneg %p85
      %p92 = scmp.eq.s32.totalorder %s12, 1
      %p93 = por %p91, %p92
      %p94 = scmp.ne.s32.totalorder %s86, %s89
      %p95 = scmp.eq.s32.totalorder %s12, 0
      %p96 = por %p94, %p95
      %p97 = scmp.ne.s32.totalorder %s86, %s89
      %p98 = scmp.eq.s32.totalorder %s17, 1
      %p99 = por %p97, %p98
      %p100 = scmp.ne.s32.totalorder %s89, %s90
      %p101 = scmp.eq.s32.totalorder %s17, 0
      %p102 = por %p100, %p101
      %p103 = scmp.ne.s32.totalorder %s89, %s90
      %p104 = scmp.eq.s32.totalorder %s18, 1
      %p105 = por %p103, %p104
      %p107 = scmp.ne.s32.totalorder %s90, %s106
      %p108 = scmp.eq.s32.totalorder %s18, 0
      %p109 = por %p107, %p108
      %s110 = ssub.s32 %s19, %s31
      %s111 = ssub.s32 %s20, %s27
      %s112 = sor.u32 %s110, %s111
      %p113 = scmp.eq.s32.totalorder %s112, 0
      %s115 = sadd.s32 %s114, 1
      %s116 = scalar_select %p113, %s114, %s115
      %p119 = pneg %p113
      %p120 = scmp.eq.s32.totalorder %s12, 1
      %p121 = por %p119, %p120
      %p122 = scmp.ne.s32.totalorder %s114, %s117
      %p123 = scmp.eq.s32.totalorder %s12, 0
      %p124 = por %p122, %p123
      %p125 = scmp.ne.s32.totalorder %s114, %s117
      %p126 = scmp.eq.s32.totalorder %s17, 1
      %p127 = por %p125, %p126
      %p128 = scmp.ne.s32.totalorder %s117, %s118
      %p129 = scmp.eq.s32.totalorder %s17, 0
      %p130 = por %p128, %p129
      %p131 = scmp.ne.s32.totalorder %s117, %s118
      %p132 = scmp.eq.s32.totalorder %s18, 1
      %p133 = por %p131, %p132
      %p135 = scmp.ne.s32.totalorder %s118, %s134
      %p136 = scmp.eq.s32.totalorder %s18, 0
      %p137 = por %p135, %p136
      %p138 = scmp.le.s32.totalorder 1, %s12
      %p139 = scmp.lt.s32.totalorder %s12, 3
      %p140 = pnand %p138, %p139
      %p141 = pneg %p140
      // Predicated region
      $region9: #{tpu_custom_call.1} parent=5 // pred_check
        _
      $region10: #{tpu_custom_call.1} parent=5 // pred_check_branch
        %143 = sbr.rel (%p140) target = $region12
      $region11: #{tpu_custom_call.1} parent=5 // pred_region
        %s144 = ssub.s32 %s12, 1
        // Predicated region
        $region13: #{tpu_custom_call.1} parent=11 // pred_check
          %p145 = pneg %p50
        $region14: #{tpu_custom_call.1} parent=11 // pred_check_branch
          %147 = sbr.rel (%p145) target = $region16
        $region15: #{tpu_custom_call.1} parent=11 // pred_region
          %p148 = scmp.lt.s32.totalorder %s22, 0
          %s149 = scalar_select %p148, %s22, 0
          %s150 = smul.addr %s149, 4
          %s151 = scalar_lea.vmem %s0, %s150
        $region16: #{tpu_custom_call.1} parent=11 // pred_fallthru
          _
        // Predicated region
        $region17: #{tpu_custom_call.1} parent=11 // pred_check
          %p152 = pneg %p76
        $region18: #{tpu_custom_call.1} parent=11 // pred_check_branch
          %154 = sbr.rel (%p152) target = $region20
        $region19: #{tpu_custom_call.1} parent=11 // pred_region
          %p155 = scmp.lt.s32.totalorder %s22, 0
          %s156 = scalar_select %p155, %s22, 0
          %s157 = smul.addr %s156, 8
          %s158 = scalar_lea.vmem %s1, %s157
        $region20: #{tpu_custom_call.1} parent=11 // pred_fallthru
          _
      $region12: #{tpu_custom_call.1} parent=5 // pred_fallthru
        _
      %p159 = scmp.lt.s32.totalorder %s12, 2
      // Predicated region
      $region21: #{tpu_custom_call.1} parent=5 // pred_check
        %p160 = pneg %p159
      $region22: #{tpu_custom_call.1} parent=5 // pred_check_branch
        %162 = sbr.rel (%p160) target = $region24
      $region23: #{tpu_custom_call.1} parent=5 // pred_region
        // Predicated region
        $region25: #{tpu_custom_call.1} parent=23 // pred_check
          %p163 = pneg %p96
        $region26: #{tpu_custom_call.1} parent=23 // pred_check_branch
          %165 = sbr.rel (%p163) target = $region28
        $region27: #{tpu_custom_call.1} parent=23 // pred_region
          %p166 = scmp.lt.s32.totalorder %s19, 1
          %s167 = scalar_select %p166, %s19, 1
          %s168 = smul.addr %s167, 3
          %s169 = smul.addr %s168, 2
          %s170 = scalar_lea.vmem %s2, %s169
        $region28: #{tpu_custom_call.1} parent=23 // pred_fallthru
          _
      $region24: #{tpu_custom_call.1} parent=5 // pred_fallthru
        _
      %p171 = scmp.le.s32.totalorder 1, %s12
      %p172 = scmp.lt.s32.totalorder %s12, 3
      %p173 = pnand %p171, %p172
      %p174 = pneg %p173
      // Predicated region
      $region29: #{tpu_custom_call.1} parent=5 // pred_check
        _
      $region30: #{tpu_custom_call.1} parent=5 // pred_check_branch
        %176 = sbr.rel (%p173) target = $region32
      $region31: #{tpu_custom_call.1} parent=5 // pred_region
        %s177 = ssub.s32 %s12, 1
        %p178 = scmp.lt.s32.totalorder %s22, 0
        %s179 = scalar_select %p178, %s22, 0
        %s180 = smul.addr %s179, 4
        %s181 = scalar_lea.vmem %s0, %s180
        %p182 = pneg %p50
        %p183 = pneg %p47
        %p184 = scmp.lt.s32.totalorder %s22, 0
        %s185 = scalar_select %p184, %s22, 0
        %s186 = smul.addr %s185, 8
        %s187 = scalar_lea.vmem %s1, %s186
        %p188 = pneg %p76
        %p189 = pneg %p73
        %p190 = scmp.lt.s32.totalorder %s21, 1
        %s191 = scalar_select %p190, %s21, 1
        %s192 = smul.addr %s191, 3
        %s193 = smul.addr %s192, 2
        %s194 = scalar_lea.vmem %s2, %s193
        %p195 = pneg %p102
        %p196 = pneg %p99
        %p197 = pneg %p130
        %p198 = pneg %p127
        %s199 = sand.u32 %s117, 1
        %s200 = scalar_lea.sflag [#allocation4], %s199
        %s201 = sand.u32 %s117, 1
        %s202 = smul.addr %s201, 12
        %s203 = scalar_lea.vmem [#allocation3], %s202
        %p204 = scmp.lt.s32.totalorder %s22, 0
        %s205 = scalar_select %p204, %s22, 0
        %s206 = smul.addr %s205, 4
        %s207 = scalar_lea.vmem %s0, %s206
        %p208 = scmp.lt.s32.totalorder %s22, 0
        %s209 = scalar_select %p208, %s22, 0
        %s210 = smul.addr %s209, 8
        %s211 = scalar_lea.vmem %s1, %s210
        %p212 = scmp.lt.s32.totalorder %s21, 1
        %s213 = scalar_select %p212, %s21, 1
        %s214 = smul.addr %s213, 3
        %s215 = smul.addr %s214, 2
        %s216 = scalar_lea.vmem %s2, %s215
        %v218 = vld [vmem:[%s216] sm:$0x3f]
        %v219 = vld [vmem:[%s207] sm:$0xf]
        %v221 = vcombine.high %v218, %v218
        %v223 = vunpack.c.l.s4 1983009808
        %v224 = vunpack.c.0.s8 %v223
        %v225 = vlaneseq
        %v226 = vshrl.u32 %v225, 7
        %v227 = vsub.s32 %v224, %v226
        %v228 = vrot.slane %v218, %v227
        %v230 = vunpack.c.l.s4 1983009808
        %v231 = vunpack.c.0.s8 %v230
        %v232 = vlaneseq
        %v233 = vshrl.u32 %v232, 7
        %v234 = vsub.s32 %v231, %v233
        %v235 = vrot.slane %v221, %v234
        %v236 = vcombine.high %v228, %v228
        %vm237 = vcmask 31744
        %v239 = vsel %vm237, %v219, 0
        %vm241 = vcmask 1041408
        %v243 = vsel %vm241, %v228, 0
        %v246 = vsel %vm241, %v236, 0
        %v249 = vsel %vm241, %v235, 0
        %251 = vmatprep.subr.bf16.mxu0 %v246
        %252 = vmatpush1.bf16.msra.mxu0 %v243
        %253 = vmatprep.subr.bf16.mxu0 0
        %254 = vmatpush1.bf16.msra.mxu0 0
        %255 = vmatprep.subr.bf16.mxu0 0
        %256 = vmatpush1.bf16.msra.mxu0 0
        %257 = vmatprep.subr.bf16.mxu0 0
        %258 = vmatpush1.bf16.msra.mxu0 0
        %259 = vmatprep.subr.bf16.mxu0 0
        %260 = vmatpush1.bf16.msra.mxu0 0
        %261 = vmatprep.subr.bf16.mxu0 0
        %262 = vmatpush1.bf16.msra.mxu0 0
        %263 = vmatprep.subr.bf16.mxu0 0
        %264 = vmatpush1.bf16.msra.mxu0 0
        %265 = vmatprep.subr.bf16.mxu0 0
        %266 = vmatpush1.bf16.msra.mxu0 0
        %267 = vmatprep.subr.bf16.mxu0 0
        %268 = vmatpush1.bf16.msra.mxu0 0
        %269 = vmatprep.subr.bf16.mxu0 0
        %270 = vmatpush1.bf16.msra.mxu0 0
        %271 = vmatprep.subr.bf16.mxu0 0
        %272 = vmatpush1.bf16.msra.mxu0 0
        %273 = vmatprep.subr.bf16.mxu0 0
        %274 = vmatpush1.bf16.msra.mxu0 0
        %275 = vmatprep.subr.bf16.mxu0 0
        %276 = vmatpush1.bf16.msra.mxu0 0
        %277 = vmatprep.subr.bf16.mxu0 0
        %278 = vmatpush1.bf16.msra.mxu0 0
        %279 = vmatprep.subr.bf16.mxu0 0
        %280 = vmatpush1.bf16.msra.mxu0 0
        %281 = vmatprep.subr.bf16.mxu0 0
        %282 = vmatpush1.bf16.msra.mxu0 0
        %283 = vmatprep.mubr.bf16.mxu0 0
        %284 = vmatmul.mubr.bf16.gmra.mrb[0].mxu0 %v239
        %v285 = vpop.f32.mrb[0].mxu0
        %v286 = vadd.f32 0.0, %v285
        %v287 = vpop.f32.mrb[0].mxu0
        %v288 = vadd.f32 0.0, %v287
        %v289 = vpop.f32.mrb[0].mxu0
        %v290 = vpop.f32.mrb[0].mxu0
        %291 = vdwg.mxu0
        %292 = vmatprep.subr.bf16.mxu0 0
        %293 = vmatpush1.bf16.msra.mxu0 %v249
        %294 = vmatprep.subr.bf16.mxu0 0
        %295 = vmatpush1.bf16.msra.mxu0 0
        %296 = vmatprep.subr.bf16.mxu0 0
        %297 = vmatpush1.bf16.msra.mxu0 0
        %298 = vmatprep.subr.bf16.mxu0 0
        %299 = vmatpush1.bf16.msra.mxu0 0
        %300 = vmatprep.subr.bf16.mxu0 0
        %301 = vmatpush1.bf16.msra.mxu0 0
        %302 = vmatprep.subr.bf16.mxu0 0
        %303 = vmatpush1.bf16.msra.mxu0 0
        %304 = vmatprep.subr.bf16.mxu0 0
        %305 = vmatpush1.bf16.msra.mxu0 0
        %306 = vmatprep.subr.bf16.mxu0 0
        %307 = vmatpush1.bf16.msra.mxu0 0
        %308 = vmatprep.subr.bf16.mxu0 0
        %309 = vmatpush1.bf16.msra.mxu0 0
        %310 = vmatprep.subr.bf16.mxu0 0
        %311 = vmatpush1.bf16.msra.mxu0 0
        %312 = vmatprep.subr.bf16.mxu0 0
        %313 = vmatpush1.bf16.msra.mxu0 0
        %314 = vmatprep.subr.bf16.mxu0 0
        %315 = vmatpush1.bf16.msra.mxu0 0
        %316 = vmatprep.subr.bf16.mxu0 0
        %317 = vmatpush1.bf16.msra.mxu0 0
        %318 = vmatprep.subr.bf16.mxu0 0
        %319 = vmatpush1.bf16.msra.mxu0 0
        %320 = vmatprep.subr.bf16.mxu0 0
        %321 = vmatpush1.bf16.msra.mxu0 0
        %322 = vmatprep.subr.bf16.mxu0 0
        %323 = vmatpush1.bf16.msra.mxu0 0
        %324 = vmatprep.mubr.bf16.mxu0 0
        %325 = vmatmul.mubr.bf16.gmra.mrb[0].mxu0 %v239
        %v326 = vpop.f32.mrb[0].mxu0
        %v327 = vadd.f32 0.0, %v326
        %v328 = vpop.f32.mrb[0].mxu0
        %v329 = vpop.f32.mrb[0].mxu0
        %v330 = vpop.f32.mrb[0].mxu0
        %331 = vdwg.mxu0
        %332 = vst [vmem:[#allocation2] sm:$0xff] %v286
        %333 = vst [vmem:[#allocation2 + $0x8] sm:$0xff] %v288
        %vm334 = vcmask 261120
        %335 = vst.msk [vmem:[#allocation2 + $0x10] sm:$0xff] %vm334, %v327
        %v336 = vld [vmem:[%s216] sm:$0x3f]
        %s337 = scalar_lea.vmem %s207, 4
        %v338 = vld [vmem:[%s337] sm:$0xf]
        %v340 = vcombine.high %v336, %v336
        %v342 = vunpack.c.l.s4 1983009808
        %v343 = vunpack.c.0.s8 %v342
        %v344 = vlaneseq
        %v345 = vshrl.u32 %v344, 7
        %v346 = vsub.s32 %v343, %v345
        %v347 = vrot.slane %v336, %v346
        %v349 = vunpack.c.l.s4 1983009808
        %v350 = vunpack.c.0.s8 %v349
        %v351 = vlaneseq
        %v352 = vshrl.u32 %v351, 7
        %v353 = vsub.s32 %v350, %v352
        %v354 = vrot.slane %v340, %v353
        %v355 = vcombine.high %v347, %v347
        %356 = vrot.lane.b32.xlu0 %v347, 127
        %v357 = vpop.permute.xlu0 %356
        %358 = vrot.lane.b32.xlu0 %v355, 127
        %v359 = vpop.permute.xlu0 %358
        %360 = vrot.lane.b32.xlu0 %v354, 127
        %v361 = vpop.permute.xlu0 %360
        %vm362 = vcmask 1039360
        %v363 = vsel %vm362, %v357, %v359
        %v364 = vsel %vm362, %v359, %v361
        %v366 = vsel %vm237, %v338, 0
        %v369 = vsel %vm241, %v363, 0
        %v372 = vsel %vm241, %v364, 0
        %v375 = vsel %vm241, %v361, 0
        %377 = vmatprep.subr.bf16.mxu0 %v372
        %378 = vmatpush1.bf16.msra.mxu0 %v369
        %379 = vmatprep.subr.bf16.mxu0 0
        %380 = vmatpush1.bf16.msra.mxu0 0
        %381 = vmatprep.subr.bf16.mxu0 0
        %382 = vmatpush1.bf16.msra.mxu0 0
        %383 = vmatprep.subr.bf16.mxu0 0
        %384 = vmatpush1.bf16.msra.mxu0 0
        %385 = vmatprep.subr.bf16.mxu0 0
        %386 = vmatpush1.bf16.msra.mxu0 0
        %387 = vmatprep.subr.bf16.mxu0 0
        %388 = vmatpush1.bf16.msra.mxu0 0
        %389 = vmatprep.subr.bf16.mxu0 0
        %390 = vmatpush1.bf16.msra.mxu0 0
        %391 = vmatprep.subr.bf16.mxu0 0
        %392 = vmatpush1.bf16.msra.mxu0 0
        %393 = vmatprep.subr.bf16.mxu0 0
        %394 = vmatpush1.bf16.msra.mxu0 0
        %395 = vmatprep.subr.bf16.mxu0 0
        %396 = vmatpush1.bf16.msra.mxu0 0
        %397 = vmatprep.subr.bf16.mxu0 0
        %398 = vmatpush1.bf16.msra.mxu0 0
        %399 = vmatprep.subr.bf16.mxu0 0
        %400 = vmatpush1.bf16.msra.mxu0 0
        %401 = vmatprep.subr.bf16.mxu0 0
        %402 = vmatpush1.bf16.msra.mxu0 0
        %403 = vmatprep.subr.bf16.mxu0 0
        %404 = vmatpush1.bf16.msra.mxu0 0
        %405 = vmatprep.subr.bf16.mxu0 0
        %406 = vmatpush1.bf16.msra.mxu0 0
        %407 = vmatprep.subr.bf16.mxu0 0
        %408 = vmatpush1.bf16.msra.mxu0 0
        %409 = vmatprep.mubr.bf16.mxu0 0
        %410 = vmatmul.mubr.bf16.gmra.mrb[0].mxu0 %v366
        %v411 = vpop.f32.mrb[0].mxu0
        %v412 = vadd.f32 0.0, %v411
        %v413 = vpop.f32.mrb[0].mxu0
        %v414 = vadd.f32 0.0, %v413
        %v415 = vpop.f32.mrb[0].mxu0
        %v416 = vpop.f32.mrb[0].mxu0
        %417 = vdwg.mxu0
        %418 = vmatprep.subr.bf16.mxu0 0
        %419 = vmatpush1.bf16.msra.mxu0 %v375
        %420 = vmatprep.subr.bf16.mxu0 0
        %421 = vmatpush1.bf16.msra.mxu0 0
        %422 = vmatprep.subr.bf16.mxu0 0
        %423 = vmatpush1.bf16.msra.mxu0 0
        %424 = vmatprep.subr.bf16.mxu0 0
        %425 = vmatpush1.bf16.msra.mxu0 0
        %426 = vmatprep.subr.bf16.mxu0 0
        %427 = vmatpush1.bf16.msra.mxu0 0
        %428 = vmatprep.subr.bf16.mxu0 0
        %429 = vmatpush1.bf16.msra.mxu0 0
        %430 = vmatprep.subr.bf16.mxu0 0
        %431 = vmatpush1.bf16.msra.mxu0 0
        %432 = vmatprep.subr.bf16.mxu0 0
        %433 = vmatpush1.bf16.msra.mxu0 0
        %434 = vmatprep.subr.bf16.mxu0 0
        %435 = vmatpush1.bf16.msra.mxu0 0
        %436 = vmatprep.subr.bf16.mxu0 0
        %437 = vmatpush1.bf16.msra.mxu0 0
        %438 = vmatprep.subr.bf16.mxu0 0
        %439 = vmatpush1.bf16.msra.mxu0 0
        %440 = vmatprep.subr.bf16.mxu0 0
        %441 = vmatpush1.bf16.msra.mxu0 0
        %442 = vmatprep.subr.bf16.mxu0 0
        %443 = vmatpush1.bf16.msra.mxu0 0
        %444 = vmatprep.subr.bf16.mxu0 0
        %445 = vmatpush1.bf16.msra.mxu0 0
        %446 = vmatprep.subr.bf16.mxu0 0
        %447 = vmatpush1.bf16.msra.mxu0 0
        %448 = vmatprep.subr.bf16.mxu0 0
        %449 = vmatpush1.bf16.msra.mxu0 0
        %450 = vmatprep.mubr.bf16.mxu0 0
        %451 = vmatmul.mubr.bf16.gmra.mrb[0].mxu0 %v366
        %v452 = vpop.f32.mrb[0].mxu0
        %v453 = vadd.f32 0.0, %v452
        %v454 = vpop.f32.mrb[0].mxu0
        %v455 = vpop.f32.mrb[0].mxu0
        %v456 = vpop.f32.mrb[0].mxu0
        %457 = vdwg.mxu0
        %v458 = vld [vmem:[#allocation2] sm:$0xff]
        %v459 = vld [vmem:[#allocation2 + $0x8] sm:$0xff]
        %v460 = vld [vmem:[#allocation2 + $0x10] sm:$0xff]
        %v461 = vadd.f32 %v458, %v412
        %v462 = vadd.f32 %v459, %v414
        %v463 = vadd.f32 %v460, %v453
        %464 = vst [vmem:[#allocation2] sm:$0xff] %v461
        %465 = vst [vmem:[#allocation2 + $0x8] sm:$0xff] %v462
        %466 = vst.msk [vmem:[#allocation2 + $0x10] sm:$0xff] %vm334, %v463
        %v467 = vld [vmem:[%s216] sm:$0x3f]
        %s468 = scalar_lea.vmem %s207, 8
        %v469 = vld [vmem:[%s468] sm:$0xf]
        %v471 = vcombine.high %v467, %v467
        %v473 = vunpack.c.l.s4 1983009808
        %v474 = vunpack.c.0.s8 %v473
        %v475 = vlaneseq
        %v476 = vshrl.u32 %v475, 7
        %v477 = vsub.s32 %v474, %v476
        %v478 = vrot.slane %v467, %v477
        %v480 = vunpack.c.l.s4 1983009808
        %v481 = vunpack.c.0.s8 %v480
        %v482 = vlaneseq
        %v483 = vshrl.u32 %v482, 7
        %v484 = vsub.s32 %v481, %v483
        %v485 = vrot.slane %v471, %v484
        %v486 = vcombine.high %v478, %v478
        %487 = vrot.lane.b32.xlu0 %v478, 126
        %v488 = vpop.permute.xlu0 %487
        %489 = vrot.lane.b32.xlu0 %v486, 126
        %v490 = vpop.permute.xlu0 %489
        %491 = vrot.lane.b32.xlu0 %v485, 126
        %v492 = vpop.permute.xlu0 %491
        %vm493 = vcmask 1031168
        %v494 = vsel %vm493, %v488, %v490
        %v495 = vsel %vm493, %v490, %v492
        %v497 = vsel %vm237, %v469, 0
        %v500 = vsel %vm241, %v494, 0
        %v503 = vsel %vm241, %v495, 0
        %v506 = vsel %vm241, %v492, 0
        %508 = vmatprep.subr.bf16.mxu0 %v503
        %509 = vmatpush1.bf16.msra.mxu0 %v500
        %510 = vmatprep.subr.bf16.mxu0 0
        %511 = vmatpush1.bf16.msra.mxu0 0
        %512 = vmatprep.subr.bf16.mxu0 0
        %513 = vmatpush1.bf16.msra.mxu0 0
        %514 = vmatprep.subr.bf16.mxu0 0
        %515 = vmatpush1.bf16.msra.mxu0 0
        %516 = vmatprep.subr.bf16.mxu0 0
        %517 = vmatpush1.bf16.msra.mxu0 0
        %518 = vmatprep.subr.bf16.mxu0 0
        %519 = vmatpush1.bf16.msra.mxu0 0
        %520 = vmatprep.subr.bf16.mxu0 0
        %521 = vmatpush1.bf16.msra.mxu0 0
        %522 = vmatprep.subr.bf16.mxu0 0
        %523 = vmatpush1.bf16.msra.mxu0 0
        %524 = vmatprep.subr.bf16.mxu0 0
        %525 = vmatpush1.bf16.msra.mxu0 0
        %526 = vmatprep.subr.bf16.mxu0 0
        %527 = vmatpush1.bf16.msra.mxu0 0
        %528 = vmatprep.subr.bf16.mxu0 0
        %529 = vmatpush1.bf16.msra.mxu0 0
        %530 = vmatprep.subr.bf16.mxu0 0
        %531 = vmatpush1.bf16.msra.mxu0 0
        %532 = vmatprep.subr.bf16.mxu0 0
        %533 = vmatpush1.bf16.msra.mxu0 0
        %534 = vmatprep.subr.bf16.mxu0 0
        %535 = vmatpush1.bf16.msra.mxu0 0
        %536 = vmatprep.subr.bf16.mxu0 0
        %537 = vmatpush1.bf16.msra.mxu0 0
        %538 = vmatprep.subr.bf16.mxu0 0
        %539 = vmatpush1.bf16.msra.mxu0 0
        %540 = vmatprep.mubr.bf16.mxu0 0
        %541 = vmatmul.mubr.bf16.gmra.mrb[0].mxu0 %v497
        %v542 = vpop.f32.mrb[0].mxu0
        %v543 = vadd.f32 0.0, %v542
        %v544 = vpop.f32.mrb[0].mxu0
        %v545 = vadd.f32 0.0, %v544
        %v546 = vpop.f32.mrb[0].mxu0
        %v547 = vpop.f32.mrb[0].mxu0
        %548 = vdwg.mxu0
        %549 = vmatprep.subr.bf16.mxu0 0
        %550 = vmatpush1.bf16.msra.mxu0 %v506
        %551 = vmatprep.subr.bf16.mxu0 0
        %552 = vmatpush1.bf16.msra.mxu0 0
        %553 = vmatprep.subr.bf16.mxu0 0
        %554 = vmatpush1.bf16.msra.mxu0 0
        %555 = vmatprep.subr.bf16.mxu0 0
        %556 = vmatpush1.bf16.msra.mxu0 0
        %557 = vmatprep.subr.bf16.mxu0 0
        %558 = vmatpush1.bf16.msra.mxu0 0
        %559 = vmatprep.subr.bf16.mxu0 0
        %560 = vmatpush1.bf16.msra.mxu0 0
        %561 = vmatprep.subr.bf16.mxu0 0
        %562 = vmatpush1.bf16.msra.mxu0 0
        %563 = vmatprep.subr.bf16.mxu0 0
        %564 = vmatpush1.bf16.msra.mxu0 0
        %565 = vmatprep.subr.bf16.mxu0 0
        %566 = vmatpush1.bf16.msra.mxu0 0
        %567 = vmatprep.subr.bf16.mxu0 0
        %568 = vmatpush1.bf16.msra.mxu0 0
        %569 = vmatprep.subr.bf16.mxu0 0
        %570 = vmatpush1.bf16.msra.mxu0 0
        %571 = vmatprep.subr.bf16.mxu0 0
        %572 = vmatpush1.bf16.msra.mxu0 0
        %573 = vmatprep.subr.bf16.mxu0 0
        %574 = vmatpush1.bf16.msra.mxu0 0
        %575 = vmatprep.subr.bf16.mxu0 0
        %576 = vmatpush1.bf16.msra.mxu0 0
        %577 = vmatprep.subr.bf16.mxu0 0
        %578 = vmatpush1.bf16.msra.mxu0 0
        %579 = vmatprep.subr.bf16.mxu0 0
        %580 = vmatpush1.bf16.msra.mxu0 0
        %581 = vmatprep.mubr.bf16.mxu0 0
        %582 = vmatmul.mubr.bf16.gmra.mrb[0].mxu0 %v497
        %v583 = vpop.f32.mrb[0].mxu0
        %v584 = vadd.f32 0.0, %v583
        %v585 = vpop.f32.mrb[0].mxu0
        %v586 = vpop.f32.mrb[0].mxu0
        %v587 = vpop.f32.mrb[0].mxu0
        %588 = vdwg.mxu0
        %v589 = vld [vmem:[#allocation2] sm:$0xff]
        %v590 = vld [vmem:[#allocation2 + $0x8] sm:$0xff]
        %v591 = vld [vmem:[#allocation2 + $0x10] sm:$0xff]
        %v592 = vadd.f32 %v589, %v543
        %v593 = vadd.f32 %v590, %v545
        %v594 = vadd.f32 %v591, %v584
        %595 = vst [vmem:[#allocation2] sm:$0xff] %v592
        %596 = vst [vmem:[#allocation2 + $0x8] sm:$0xff] %v593
        %597 = vst.msk [vmem:[#allocation2 + $0x10] sm:$0xff] %vm334, %v594
        %v598 = vld [vmem:[%s216] sm:$0x3f]
        %s599 = scalar_lea.vmem %s207, 12
        %v600 = vld [vmem:[%s599] sm:$0xf]
        %v602 = vcombine.high %v598, %v598
        %v604 = vunpack.c.l.s4 1983009808
        %v605 = vunpack.c.0.s8 %v604
        %v606 = vlaneseq
        %v607 = vshrl.u32 %v606, 7
        %v608 = vsub.s32 %v605, %v607
        %v609 = vrot.slane %v598, %v608
        %v611 = vunpack.c.l.s4 1983009808
        %v612 = vunpack.c.0.s8 %v611
        %v613 = vlaneseq
        %v614 = vshrl.u32 %v613, 7
        %v615 = vsub.s32 %v612, %v614
        %v616 = vrot.slane %v602, %v615
        %v617 = vcombine.high %v609, %v609
        %618 = vrot.lane.b32.xlu0 %v609, 110
        %v619 = vpop.permute.xlu0 %618
        %620 = vrot.lane.b32.xlu0 %v617, 110
        %v621 = vpop.permute.xlu0 %620
        %622 = vrot.lane.b32.xlu0 %v616, 110
        %v623 = vpop.permute.xlu0 %622
        %vm624 = vcmask 900096
        %v625 = vsel %vm624, %v619, %v621
        %v626 = vsel %vm624, %v621, %v623
        %v628 = vsel %vm237, %v600, 0
        %v631 = vsel %vm241, %v625, 0
        %v634 = vsel %vm241, %v626, 0
        %v637 = vsel %vm241, %v623, 0
        %639 = vmatprep.subr.bf16.mxu0 %v634
        %640 = vmatpush1.bf16.msra.mxu0 %v631
        %641 = vmatprep.subr.bf16.mxu0 0
        %642 = vmatpush1.bf16.msra.mxu0 0
        %643 = vmatprep.subr.bf16.mxu0 0
        %644 = vmatpush1.bf16.msra.mxu0 0
        %645 = vmatprep.subr.bf16.mxu0 0
        %646 = vmatpush1.bf16.msra.mxu0 0
        %647 = vmatprep.subr.bf16.mxu0 0
        %648 = vmatpush1.bf16.msra.mxu0 0
        %649 = vmatprep.subr.bf16.mxu0 0
        %650 = vmatpush1.bf16.msra.mxu0 0
        %651 = vmatprep.subr.bf16.mxu0 0
        %652 = vmatpush1.bf16.msra.mxu0 0
        %653 = vmatprep.subr.bf16.mxu0 0
        %654 = vmatpush1.bf16.msra.mxu0 0
        %655 = vmatprep.subr.bf16.mxu0 0
        %656 = vmatpush1.bf16.msra.mxu0 0
        %657 = vmatprep.subr.bf16.mxu0 0
        %658 = vmatpush1.bf16.msra.mxu0 0
        %659 = vmatprep.subr.bf16.mxu0 0
        %660 = vmatpush1.bf16.msra.mxu0 0
        %661 = vmatprep.subr.bf16.mxu0 0
        %662 = vmatpush1.bf16.msra.mxu0 0
        %663 = vmatprep.subr.bf16.mxu0 0
        %664 = vmatpush1.bf16.msra.mxu0 0
        %665 = vmatprep.subr.bf16.mxu0 0
        %666 = vmatpush1.bf16.msra.mxu0 0
        %667 = vmatprep.subr.bf16.mxu0 0
        %668 = vmatpush1.bf16.msra.mxu0 0
        %669 = vmatprep.subr.bf16.mxu0 0
        %670 = vmatpush1.bf16.msra.mxu0 0
        %671 = vmatprep.mubr.bf16.mxu0 0
        %672 = vmatmul.mubr.bf16.gmra.mrb[0].mxu0 %v628
        %v673 = vpop.f32.mrb[0].mxu0
        %v674 = vadd.f32 0.0, %v673
        %v675 = vpop.f32.mrb[0].mxu0
        %v676 = vadd.f32 0.0, %v675
        %v677 = vpop.f32.mrb[0].mxu0
        %v678 = vpop.f32.mrb[0].mxu0
        %679 = vdwg.mxu0
        %680 = vmatprep.subr.bf16.mxu0 0
        %681 = vmatpush1.bf16.msra.mxu0 %v637
        %682 = vmatprep.subr.bf16.mxu0 0
        %683 = vmatpush1.bf16.msra.mxu0 0
        %684 = vmatprep.subr.bf16.mxu0 0
        %685 = vmatpush1.bf16.msra.mxu0 0
        %686 = vmatprep.subr.bf16.mxu0 0
        %687 = vmatpush1.bf16.msra.mxu0 0
        %688 = vmatprep.subr.bf16.mxu0 0
        %689 = vmatpush1.bf16.msra.mxu0 0
        %690 = vmatprep.subr.bf16.mxu0 0
        %691 = vmatpush1.bf16.msra.mxu0 0
        %692 = vmatprep.subr.bf16.mxu0 0
        %693 = vmatpush1.bf16.msra.mxu0 0
        %694 = vmatprep.subr.bf16.mxu0 0
        %695 = vmatpush1.bf16.msra.mxu0 0
        %696 = vmatprep.subr.bf16.mxu0 0
        %697 = vmatpush1.bf16.msra.mxu0 0
        %698 = vmatprep.subr.bf16.mxu0 0
        %699 = vmatpush1.bf16.msra.mxu0 0
        %700 = vmatprep.subr.bf16.mxu0 0
        %701 = vmatpush1.bf16.msra.mxu0 0
        %702 = vmatprep.subr.bf16.mxu0 0
        %703 = vmatpush1.bf16.msra.mxu0 0
        %704 = vmatprep.subr.bf16.mxu0 0
        %705 = vmatpush1.bf16.msra.mxu0 0
        %706 = vmatprep.subr.bf16.mxu0 0
        %707 = vmatpush1.bf16.msra.mxu0 0
        %708 = vmatprep.subr.bf16.mxu0 0
        %709 = vmatpush1.bf16.msra.mxu0 0
        %710 = vmatprep.subr.bf16.mxu0 0
        %711 = vmatpush1.bf16.msra.mxu0 0
        %712 = vmatprep.mubr.bf16.mxu0 0
        %713 = vmatmul.mubr.bf16.gmra.mrb[0].mxu0 %v628
        %v714 = vpop.f32.mrb[0].mxu0
        %v715 = vadd.f32 0.0, %v714
        %v716 = vpop.f32.mrb[0].mxu0
        %v717 = vpop.f32.mrb[0].mxu0
        %v718 = vpop.f32.mrb[0].mxu0
        %719 = vdwg.mxu0
        %v720 = vld [vmem:[#allocation2] sm:$0xff]
        %v721 = vld [vmem:[#allocation2 + $0x8] sm:$0xff]
        %v722 = vld [vmem:[#allocation2 + $0x10] sm:$0xff]
        %v723 = vadd.f32 %v720, %v674
        %v724 = vadd.f32 %v721, %v676
        %v725 = vadd.f32 %v722, %v715
        %726 = vst [vmem:[#allocation2] sm:$0xff] %v723
        %727 = vst [vmem:[#allocation2 + $0x8] sm:$0xff] %v724
        %728 = vst.msk [vmem:[#allocation2 + $0x10] sm:$0xff] %vm334, %v725
        %v729 = vld [vmem:[%s216] sm:$0x3f]
        %s730 = scalar_lea.vmem %s207, 16
        %v731 = vld [vmem:[%s730] sm:$0xf]
        %v733 = vcombine.high %v729, %v729
        %v735 = vunpack.c.l.s4 1983009808
        %v736 = vunpack.c.0.s8 %v735
        %v737 = vlaneseq
        %v738 = vshrl.u32 %v737, 7
        %v739 = vsub.s32 %v736, %v738
        %v740 = vrot.slane %v729, %v739
        %v742 = vunpack.c.l.s4 1983009808
        %v743 = vunpack.c.0.s8 %v742
        %v744 = vlaneseq
        %v745 = vshrl.u32 %v744, 7
        %v746 = vsub.s32 %v743, %v745
        %v747 = vrot.slane %v733, %v746
        %v748 = vcombine.high %v740, %v740
        %749 = vrot.lane.b32.xlu0 %v740, 109
        %v750 = vpop.permute.xlu0 %749
        %751 = vrot.lane.b32.xlu0 %v748, 109
        %v752 = vpop.permute.xlu0 %751
        %753 = vrot.lane.b32.xlu0 %v747, 109
        %v754 = vpop.permute.xlu0 %753
        %vm755 = vcmask 891904
        %v756 = vsel %vm755, %v750, %v752
        %v757 = vsel %vm755, %v752, %v754
        %v759 = vsel %vm237, %v731, 0
        %v762 = vsel %vm241, %v756, 0
        %v765 = vsel %vm241, %v757, 0
        %v768 = vsel %vm241, %v754, 0
        %770 = vmatprep.subr.bf16.mxu0 %v765
        %771 = vmatpush1.bf16.msra.mxu0 %v762
        %772 = vmatprep.subr.bf16.mxu0 0
        %773 = vmatpush1.bf16.msra.mxu0 0
        %774 = vmatprep.subr.bf16.mxu0 0
        %775 = vmatpush1.bf16.msra.mxu0 0
        %776 = vmatprep.subr.bf16.mxu0 0
        %777 = vmatpush1.bf16.msra.mxu0 0
        %778 = vmatprep.subr.bf16.mxu0 0
        %779 = vmatpush1.bf16.msra.mxu0 0
        %780 = vmatprep.subr.bf16.mxu0 0
        %781 = vmatpush1.bf16.msra.mxu0 0
        %782 = vmatprep.subr.bf16.mxu0 0
        %783 = vmatpush1.bf16.msra.mxu0 0
        %784 = vmatprep.subr.bf16.mxu0 0
        %785 = vmatpush1.bf16.msra.mxu0 0
        %786 = vmatprep.subr.bf16.mxu0 0
        %787 = vmatpush1.bf16.msra.mxu0 0
        %788 = vmatprep.subr.bf16.mxu0 0
        %789 = vmatpush1.bf16.msra.mxu0 0
        %790 = vmatprep.subr.bf16.mxu0 0
        %791 = vmatpush1.bf16.msra.mxu0 0
        %792 = vmatprep.subr.bf16.mxu0 0
        %793 = vmatpush1.bf16.msra.mxu0 0
        %794 = vmatprep.subr.bf16.mxu0 0
        %795 = vmatpush1.bf16.msra.mxu0 0
        %796 = vmatprep.subr.bf16.mxu0 0
        %797 = vmatpush1.bf16.msra.mxu0 0
        %798 = vmatprep.subr.bf16.mxu0 0
        %799 = vmatpush1.bf16.msra.mxu0 0
        %800 = vmatprep.subr.bf16.mxu0 0
        %801 = vmatpush1.bf16.msra.mxu0 0
        %802 = vmatprep.mubr.bf16.mxu0 0
        %803 = vmatmul.mubr.bf16.gmra.mrb[0].mxu0 %v759
        %v804 = vpop.f32.mrb[0].mxu0
        %v805 = vadd.f32 0.0, %v804
        %v806 = vpop.f32.mrb[0].mxu0
        %v807 = vadd.f32 0.0, %v806
        %v808 = vpop.f32.mrb[0].mxu0
        %v809 = vpop.f32.mrb[0].mxu0
        %810 = vdwg.mxu0
        %811 = vmatprep.subr.bf16.mxu0 0
        %812 = vmatpush1.bf16.msra.mxu0 %v768
        %813 = vmatprep.subr.bf16.mxu0 0
        %814 = vmatpush1.bf16.msra.mxu0 0
        %815 = vmatprep.subr.bf16.mxu0 0
        %816 = vmatpush1.bf16.msra.mxu0 0
        %817 = vmatprep.subr.bf16.mxu0 0
        %818 = vmatpush1.bf16.msra.mxu0 0
        %819 = vmatprep.subr.bf16.mxu0 0
        %820 = vmatpush1.bf16.msra.mxu0 0
        %821 = vmatprep.subr.bf16.mxu0 0
        %822 = vmatpush1.bf16.msra.mxu0 0
        %823 = vmatprep.subr.bf16.mxu0 0
        %824 = vmatpush1.bf16.msra.mxu0 0
        %825 = vmatprep.subr.bf16.mxu0 0
        %826 = vmatpush1.bf16.msra.mxu0 0
        %827 = vmatprep.subr.bf16.mxu0 0
        %828 = vmatpush1.bf16.msra.mxu0 0
        %829 = vmatprep.subr.bf16.mxu0 0
        %830 = vmatpush1.bf16.msra.mxu0 0
        %831 = vmatprep.subr.bf16.mxu0 0
        %832 = vmatpush1.bf16.msra.mxu0 0
        %833 = vmatprep.subr.bf16.mxu0 0
        %834 = vmatpush1.bf16.msra.mxu0 0
        %835 = vmatprep.subr.bf16.mxu0 0
        %836 = vmatpush1.bf16.msra.mxu0 0
        %837 = vmatprep.subr.bf16.mxu0 0
        %838 = vmatpush1.bf16.msra.mxu0 0
        %839 = vmatprep.subr.bf16.mxu0 0
        %840 = vmatpush1.bf16.msra.mxu0 0
        %841 = vmatprep.subr.bf16.mxu0 0
        %842 = vmatpush1.bf16.msra.mxu0 0
        %843 = vmatprep.mubr.bf16.mxu0 0
        %844 = vmatmul.mubr.bf16.gmra.mrb[0].mxu0 %v759
        %v845 = vpop.f32.mrb[0].mxu0
        %v846 = vadd.f32 0.0, %v845
        %v847 = vpop.f32.mrb[0].mxu0
        %v848 = vpop.f32.mrb[0].mxu0
        %v849 = vpop.f32.mrb[0].mxu0
        %850 = vdwg.mxu0
        %v851 = vld [vmem:[#allocation2] sm:$0xff]
        %v852 = vld [vmem:[#allocation2 + $0x8] sm:$0xff]
        %v853 = vld [vmem:[#allocation2 + $0x10] sm:$0xff]
        %v854 = vadd.f32 %v851, %v805
        %v855 = vadd.f32 %v852, %v807
        %v856 = vadd.f32 %v853, %v846
        %857 = vst [vmem:[#allocation2] sm:$0xff] %v854
        %858 = vst [vmem:[#allocation2 + $0x8] sm:$0xff] %v855
        %859 = vst.msk [vmem:[#allocation2 + $0x10] sm:$0xff] %vm334, %v856
        %v860 = vld [vmem:[%s216] sm:$0x3f]
        %s861 = scalar_lea.vmem %s207, 20
        %v862 = vld [vmem:[%s861] sm:$0xf]
        %v864 = vcombine.high %v860, %v860
        %v866 = vunpack.c.l.s4 1983009808
        %v867 = vunpack.c.0.s8 %v866
        %v868 = vlaneseq
        %v869 = vshrl.u32 %v868, 7
        %v870 = vsub.s32 %v867, %v869
        %v871 = vrot.slane %v860, %v870
        %v873 = vunpack.c.l.s4 1983009808
        %v874 = vunpack.c.0.s8 %v873
        %v875 = vlaneseq
        %v876 = vshrl.u32 %v875, 7
        %v877 = vsub.s32 %v874, %v876
        %v878 = vrot.slane %v864, %v877
        %v879 = vcombine.high %v871, %v871
        %880 = vrot.lane.b32.xlu0 %v871, 108
        %v881 = vpop.permute.xlu0 %880
        %882 = vrot.lane.b32.xlu0 %v879, 108
        %v883 = vpop.permute.xlu0 %882
        %884 = vrot.lane.b32.xlu0 %v878, 108
        %v885 = vpop.permute.xlu0 %884
        %vm886 = vcmask 883712
        %v887 = vsel %vm886, %v881, %v883
        %v888 = vsel %vm886, %v883, %v885
        %v890 = vsel %vm237, %v862, 0
        %v893 = vsel %vm241, %v887, 0
        %v896 = vsel %vm241, %v888, 0
        %v899 = vsel %vm241, %v885, 0
        %901 = vmatprep.subr.bf16.mxu0 %v896
        %902 = vmatpush1.bf16.msra.mxu0 %v893
        %903 = vmatprep.subr.bf16.mxu0 0
        %904 = vmatpush1.bf16.msra.mxu0 0
        %905 = vmatprep.subr.bf16.mxu0 0
        %906 = vmatpush1.bf16.msra.mxu0 0
        %907 = vmatprep.subr.bf16.mxu0 0
        %908 = vmatpush1.bf16.msra.mxu0 0
        %909 = vmatprep.subr.bf16.mxu0 0
        %910 = vmatpush1.bf16.msra.mxu0 0
        %911 = vmatprep.subr.bf16.mxu0 0
        %912 = vmatpush1.bf16.msra.mxu0 0
        %913 = vmatprep.subr.bf16.mxu0 0
        %914 = vmatpush1.bf16.msra.mxu0 0
        %915 = vmatprep.subr.bf16.mxu0 0
        %916 = vmatpush1.bf16.msra.mxu0 0
        %917 = vmatprep.subr.bf16.mxu0 0
        %918 = vmatpush1.bf16.msra.mxu0 0
        %919 = vmatprep.subr.bf16.mxu0 0
        %920 = vmatpush1.bf16.msra.mxu0 0
        %921 = vmatprep.subr.bf16.mxu0 0
        %922 = vmatpush1.bf16.msra.mxu0 0
        %923 = vmatprep.subr.bf16.mxu0 0
        %924 = vmatpush1.bf16.msra.mxu0 0
        %925 = vmatprep.subr.bf16.mxu0 0
        %926 = vmatpush1.bf16.msra.mxu0 0
        %927 = vmatprep.subr.bf16.mxu0 0
        %928 = vmatpush1.bf16.msra.mxu0 0
        %929 = vmatprep.subr.bf16.mxu0 0
        %930 = vmatpush1.bf16.msra.mxu0 0
        %931 = vmatprep.subr.bf16.mxu0 0
        %932 = vmatpush1.bf16.msra.mxu0 0
        %933 = vmatprep.mubr.bf16.mxu0 0
        %934 = vmatmul.mubr.bf16.gmra.mrb[0].mxu0 %v890
        %v935 = vpop.f32.mrb[0].mxu0
        %v936 = vadd.f32 0.0, %v935
        %v937 = vpop.f32.mrb[0].mxu0
        %v938 = vadd.f32 0.0, %v937
        %v939 = vpop.f32.mrb[0].mxu0
        %v940 = vpop.f32.mrb[0].mxu0
        %941 = vdwg.mxu0
        %942 = vmatprep.subr.bf16.mxu0 0
        %943 = vmatpush1.bf16.msra.mxu0 %v899
        %944 = vmatprep.subr.bf16.mxu0 0
        %945 = vmatpush1.bf16.msra.mxu0 0
        %946 = vmatprep.subr.bf16.mxu0 0
        %947 = vmatpush1.bf16.msra.mxu0 0
        %948 = vmatprep.subr.bf16.mxu0 0
        %949 = vmatpush1.bf16.msra.mxu0 0
        %950 = vmatprep.subr.bf16.mxu0 0
        %951 = vmatpush1.bf16.msra.mxu0 0
        %952 = vmatprep.subr.bf16.mxu0 0
        %953 = vmatpush1.bf16.msra.mxu0 0
        %954 = vmatprep.subr.bf16.mxu0 0
        %955 = vmatpush1.bf16.msra.mxu0 0
        %956 = vmatprep.subr.bf16.mxu0 0
        %957 = vmatpush1.bf16.msra.mxu0 0
        %958 = vmatprep.subr.bf16.mxu0 0
        %959 = vmatpush1.bf16.msra.mxu0 0
        %960 = vmatprep.subr.bf16.mxu0 0
        %961 = vmatpush1.bf16.msra.mxu0 0
        %962 = vmatprep.subr.bf16.mxu0 0
        %963 = vmatpush1.bf16.msra.mxu0 0
        %964 = vmatprep.subr.bf16.mxu0 0
        %965 = vmatpush1.bf16.msra.mxu0 0
        %966 = vmatprep.subr.bf16.mxu0 0
        %967 = vmatpush1.bf16.msra.mxu0 0
        %968 = vmatprep.subr.bf16.mxu0 0
        %969 = vmatpush1.bf16.msra.mxu0 0
        %970 = vmatprep.subr.bf16.mxu0 0
        %971 = vmatpush1.bf16.msra.mxu0 0
        %972 = vmatprep.subr.bf16.mxu0 0
        %973 = vmatpush1.bf16.msra.mxu0 0
        %974 = vmatprep.mubr.bf16.mxu0 0
        %975 = vmatmul.mubr.bf16.gmra.mrb[0].mxu0 %v890
        %v976 = vpop.f32.mrb[0].mxu0
        %v977 = vadd.f32 0.0, %v976
        %v978 = vpop.f32.mrb[0].mxu0
        %v979 = vpop.f32.mrb[0].mxu0
        %v980 = vpop.f32.mrb[0].mxu0
        %981 = vdwg.mxu0
        %v982 = vld [vmem:[#allocation2] sm:$0xff]
        %v983 = vld [vmem:[#allocation2 + $0x8] sm:$0xff]
        %v984 = vld [vmem:[#allocation2 + $0x10] sm:$0xff]
        %v985 = vadd.f32 %v982, %v936
        %v986 = vadd.f32 %v983, %v938
        %v987 = vadd.f32 %v984, %v977
        %988 = vst [vmem:[#allocation2] sm:$0xff] %v985
        %989 = vst [vmem:[#allocation2 + $0x8] sm:$0xff] %v986
        %990 = vst.msk [vmem:[#allocation2 + $0x10] sm:$0xff] %vm334, %v987
        %v991 = vld [vmem:[%s216] sm:$0x3f]
        %s992 = scalar_lea.vmem %s207, 24
        %v993 = vld [vmem:[%s992] sm:$0xf]
        %v995 = vcombine.high %v991, %v991
        %v997 = vunpack.c.l.s4 1983009808
        %v998 = vunpack.c.0.s8 %v997
        %v999 = vlaneseq
        %v1000 = vshrl.u32 %v999, 7
        %v1001 = vsub.s32 %v998, %v1000
        %v1002 = vrot.slane %v991, %v1001
        %v1004 = vunpack.c.l.s4 1983009808
        %v1005 = vunpack.c.0.s8 %v1004
        %v1006 = vlaneseq
        %v1007 = vshrl.u32 %v1006, 7
        %v1008 = vsub.s32 %v1005, %v1007
        %v1009 = vrot.slane %v995, %v1008
        %v1010 = vcombine.high %v1002, %v1002
        %1011 = vrot.lane.b32.xlu0 %v1002, 92
        %v1012 = vpop.permute.xlu0 %1011
        %1013 = vrot.lane.b32.xlu0 %v1010, 92
        %v1014 = vpop.permute.xlu0 %1013
        %1015 = vrot.lane.b32.xlu0 %v1009, 92
        %v1016 = vpop.permute.xlu0 %1015
        %vm1017 = vcmask 752640
        %v1018 = vsel %vm1017, %v1012, %v1014
        %v1019 = vsel %vm1017, %v1014, %v1016
        %v1021 = vsel %vm237, %v993, 0
        %v1024 = vsel %vm241, %v1018, 0
        %v1027 = vsel %vm241, %v1019, 0
        %v1030 = vsel %vm241, %v1016, 0
        %1032 = vmatprep.subr.bf16.mxu0 %v1027
        %1033 = vmatpush1.bf16.msra.mxu0 %v1024
        %1034 = vmatprep.subr.bf16.mxu0 0
        %1035 = vmatpush1.bf16.msra.mxu0 0
        %1036 = vmatprep.subr.bf16.mxu0 0
        %1037 = vmatpush1.bf16.msra.mxu0 0
        %1038 = vmatprep.subr.bf16.mxu0 0
        %1039 = vmatpush1.bf16.msra.mxu0 0
        %1040 = vmatprep.subr.bf16.mxu0 0
        %1041 = vmatpush1.bf16.msra.mxu0 0
        %1042 = vmatprep.subr.bf16.mxu0 0
        %1043 = vmatpush1.bf16.msra.mxu0 0
        %1044 = vmatprep.subr.bf16.mxu0 0
        %1045 = vmatpush1.bf16.msra.mxu0 0
        %1046 = vmatprep.subr.bf16.mxu0 0
        %1047 = vmatpush1.bf16.msra.mxu0 0
        %1048 = vmatprep.subr.bf16.mxu0 0
        %1049 = vmatpush1.bf16.msra.mxu0 0
        %1050 = vmatprep.subr.bf16.mxu0 0
        %1051 = vmatpush1.bf16.msra.mxu0 0
        %1052 = vmatprep.subr.bf16.mxu0 0
        %1053 = vmatpush1.bf16.msra.mxu0 0
        %1054 = vmatprep.subr.bf16.mxu0 0
        %1055 = vmatpush1.bf16.msra.mxu0 0
        %1056 = vmatprep.subr.bf16.mxu0 0
        %1057 = vmatpush1.bf16.msra.mxu0 0
        %1058 = vmatprep.subr.bf16.mxu0 0
        %1059 = vmatpush1.bf16.msra.mxu0 0
        %1060 = vmatprep.subr.bf16.mxu0 0
        %1061 = vmatpush1.bf16.msra.mxu0 0
        %1062 = vmatprep.subr.bf16.mxu0 0
        %1063 = vmatpush1.bf16.msra.mxu0 0
        %1064 = vmatprep.mubr.bf16.mxu0 0
        %1065 = vmatmul.mubr.bf16.gmra.mrb[0].mxu0 %v1021
        %v1066 = vpop.f32.mrb[0].mxu0
        %v1067 = vadd.f32 0.0, %v1066
        %v1068 = vpop.f32.mrb[0].mxu0
        %v1069 = vadd.f32 0.0, %v1068
        %v1070 = vpop.f32.mrb[0].mxu0
        %v1071 = vpop.f32.mrb[0].mxu0
        %1072 = vdwg.mxu0
        %1073 = vmatprep.subr.bf16.mxu0 0
        %1074 = vmatpush1.bf16.msra.mxu0 %v1030
        %1075 = vmatprep.subr.bf16.mxu0 0
        %1076 = vmatpush1.bf16.msra.mxu0 0
        %1077 = vmatprep.subr.bf16.mxu0 0
        %1078 = vmatpush1.bf16.msra.mxu0 0
        %1079 = vmatprep.subr.bf16.mxu0 0
        %1080 = vmatpush1.bf16.msra.mxu0 0
        %1081 = vmatprep.subr.bf16.mxu0 0
        %1082 = vmatpush1.bf16.msra.mxu0 0
        %1083 = vmatprep.subr.bf16.mxu0 0
        %1084 = vmatpush1.bf16.msra.mxu0 0
        %1085 = vmatprep.subr.bf16.mxu0 0
        %1086 = vmatpush1.bf16.msra.mxu0 0
        %1087 = vmatprep.subr.bf16.mxu0 0
        %1088 = vmatpush1.bf16.msra.mxu0 0
        %1089 = vmatprep.subr.bf16.mxu0 0
        %1090 = vmatpush1.bf16.msra.mxu0 0
        %1091 = vmatprep.subr.bf16.mxu0 0
        %1092 = vmatpush1.bf16.msra.mxu0 0
        %1093 = vmatprep.subr.bf16.mxu0 0
        %1094 = vmatpush1.bf16.msra.mxu0 0
        %1095 = vmatprep.subr.bf16.mxu0 0
        %1096 = vmatpush1.bf16.msra.mxu0 0
        %1097 = vmatprep.subr.bf16.mxu0 0
        %1098 = vmatpush1.bf16.msra.mxu0 0
        %1099 = vmatprep.subr.bf16.mxu0 0
        %1100 = vmatpush1.bf16.msra.mxu0 0
        %1101 = vmatprep.subr.bf16.mxu0 0
        %1102 = vmatpush1.bf16.msra.mxu0 0
        %1103 = vmatprep.subr.bf16.mxu0 0
        %1104 = vmatpush1.bf16.msra.mxu0 0
        %1105 = vmatprep.mubr.bf16.mxu0 0
        %1106 = vmatmul.mubr.bf16.gmra.mrb[0].mxu0 %v1021
        %v1107 = vpop.f32.mrb[0].mxu0
        %v1108 = vadd.f32 0.0, %v1107
        %v1109 = vpop.f32.mrb[0].mxu0
        %v1110 = vpop.f32.mrb[0].mxu0
        %v1111 = vpop.f32.mrb[0].mxu0
        %1112 = vdwg.mxu0
        %v1113 = vld [vmem:[#allocation2] sm:$0xff]
        %v1114 = vld [vmem:[#allocation2 + $0x8] sm:$0xff]
        %v1115 = vld [vmem:[#allocation2 + $0x10] sm:$0xff]
        %v1116 = vadd.f32 %v1113, %v1067
        %v1117 = vadd.f32 %v1114, %v1069
        %v1118 = vadd.f32 %v1115, %v1108
        %1119 = vst [vmem:[#allocation2] sm:$0xff] %v1116
        %1120 = vst [vmem:[#allocation2 + $0x8] sm:$0xff] %v1117
        %1121 = vst.msk [vmem:[#allocation2 + $0x10] sm:$0xff] %vm334, %v1118
        %v1122 = vld [vmem:[%s216] sm:$0x3f]
        %s1123 = scalar_lea.vmem %s207, 28
        %v1124 = vld [vmem:[%s1123] sm:$0xf]
        %v1126 = vcombine.high %v1122, %v1122
        %v1128 = vunpack.c.l.s4 1983009808
        %v1129 = vunpack.c.0.s8 %v1128
        %v1130 = vlaneseq
        %v1131 = vshrl.u32 %v1130, 7
        %v1132 = vsub.s32 %v1129, %v1131
        %v1133 = vrot.slane %v1122, %v1132
        %v1135 = vunpack.c.l.s4 1983009808
        %v1136 = vunpack.c.0.s8 %v1135
        %v1137 = vlaneseq
        %v1138 = vshrl.u32 %v1137, 7
        %v1139 = vsub.s32 %v1136, %v1138
        %v1140 = vrot.slane %v1126, %v1139
        %v1141 = vcombine.high %v1133, %v1133
        %1142 = vrot.lane.b32.xlu0 %v1133, 91
        %v1143 = vpop.permute.xlu0 %1142
        %1144 = vrot.lane.b32.xlu0 %v1141, 91
        %v1145 = vpop.permute.xlu0 %1144
        %1146 = vrot.lane.b32.xlu0 %v1140, 91
        %v1147 = vpop.permute.xlu0 %1146
        %vm1148 = vcmask 744448
        %v1149 = vsel %vm1148, %v1143, %v1145
        %v1150 = vsel %vm1148, %v1145, %v1147
        %v1152 = vsel %vm237, %v1124, 0
        %v1155 = vsel %vm241, %v1149, 0
        %v1158 = vsel %vm241, %v1150, 0
        %v1161 = vsel %vm241, %v1147, 0
        %1163 = vmatprep.subr.bf16.mxu0 %v1158
        %1164 = vmatpush1.bf16.msra.mxu0 %v1155
        %1165 = vmatprep.subr.bf16.mxu0 0
        %1166 = vmatpush1.bf16.msra.mxu0 0
        %1167 = vmatprep.subr.bf16.mxu0 0
        %1168 = vmatpush1.bf16.msra.mxu0 0
        %1169 = vmatprep.subr.bf16.mxu0 0
        %1170 = vmatpush1.bf16.msra.mxu0 0
        %1171 = vmatprep.subr.bf16.mxu0 0
        %1172 = vmatpush1.bf16.msra.mxu0 0
        %1173 = vmatprep.subr.bf16.mxu0 0
        %1174 = vmatpush1.bf16.msra.mxu0 0
        %1175 = vmatprep.subr.bf16.mxu0 0
        %1176 = vmatpush1.bf16.msra.mxu0 0
        %1177 = vmatprep.subr.bf16.mxu0 0
        %1178 = vmatpush1.bf16.msra.mxu0 0
        %1179 = vmatprep.subr.bf16.mxu0 0
        %1180 = vmatpush1.bf16.msra.mxu0 0
        %1181 = vmatprep.subr.bf16.mxu0 0
        %1182 = vmatpush1.bf16.msra.mxu0 0
        %1183 = vmatprep.subr.bf16.mxu0 0
        %1184 = vmatpush1.bf16.msra.mxu0 0
        %1185 = vmatprep.subr.bf16.mxu0 0
        %1186 = vmatpush1.bf16.msra.mxu0 0
        %1187 = vmatprep.subr.bf16.mxu0 0
        %1188 = vmatpush1.bf16.msra.mxu0 0
        %1189 = vmatprep.subr.bf16.mxu0 0
        %1190 = vmatpush1.bf16.msra.mxu0 0
        %1191 = vmatprep.subr.bf16.mxu0 0
        %1192 = vmatpush1.bf16.msra.mxu0 0
        %1193 = vmatprep.subr.bf16.mxu0 0
        %1194 = vmatpush1.bf16.msra.mxu0 0
        %1195 = vmatprep.mubr.bf16.mxu0 0
        %1196 = vmatmul.mubr.bf16.gmra.mrb[0].mxu0 %v1152
        %v1197 = vpop.f32.mrb[0].mxu0
        %v1198 = vadd.f32 0.0, %v1197
        %v1199 = vpop.f32.mrb[0].mxu0
        %v1200 = vadd.f32 0.0, %v1199
        %v1201 = vpop.f32.mrb[0].mxu0
        %v1202 = vpop.f32.mrb[0].mxu0
        %1203 = vdwg.mxu0
        %1204 = vmatprep.subr.bf16.mxu0 0
        %1205 = vmatpush1.bf16.msra.mxu0 %v1161
        %1206 = vmatprep.subr.bf16.mxu0 0
        %1207 = vmatpush1.bf16.msra.mxu0 0
        %1208 = vmatprep.subr.bf16.mxu0 0
        %1209 = vmatpush1.bf16.msra.mxu0 0
        %1210 = vmatprep.subr.bf16.mxu0 0
        %1211 = vmatpush1.bf16.msra.mxu0 0
        %1212 = vmatprep.subr.bf16.mxu0 0
        %1213 = vmatpush1.bf16.msra.mxu0 0
        %1214 = vmatprep.subr.bf16.mxu0 0
        %1215 = vmatpush1.bf16.msra.mxu0 0
        %1216 = vmatprep.subr.bf16.mxu0 0
        %1217 = vmatpush1.bf16.msra.mxu0 0
        %1218 = vmatprep.subr.bf16.mxu0 0
        %1219 = vmatpush1.bf16.msra.mxu0 0
        %1220 = vmatprep.subr.bf16.mxu0 0
        %1221 = vmatpush1.bf16.msra.mxu0 0
        %1222 = vmatprep.subr.bf16.mxu0 0
        %1223 = vmatpush1.bf16.msra.mxu0 0
        %1224 = vmatprep.subr.bf16.mxu0 0
        %1225 = vmatpush1.bf16.msra.mxu0 0
        %1226 = vmatprep.subr.bf16.mxu0 0
        %1227 = vmatpush1.bf16.msra.mxu0 0
        %1228 = vmatprep.subr.bf16.mxu0 0
        %1229 = vmatpush1.bf16.msra.mxu0 0
        %1230 = vmatprep.subr.bf16.mxu0 0
        %1231 = vmatpush1.bf16.msra.mxu0 0
        %1232 = vmatprep.subr.bf16.mxu0 0
        %1233 = vmatpush1.bf16.msra.mxu0 0
        %1234 = vmatprep.subr.bf16.mxu0 0
        %1235 = vmatpush1.bf16.msra.mxu0 0
        %1236 = vmatprep.mubr.bf16.mxu0 0
        %1237 = vmatmul.mubr.bf16.gmra.mrb[0].mxu0 %v1152
        %v1238 = vpop.f32.mrb[0].mxu0
        %v1239 = vadd.f32 0.0, %v1238
        %v1240 = vpop.f32.mrb[0].mxu0
        %v1241 = vpop.f32.mrb[0].mxu0
        %v1242 = vpop.f32.mrb[0].mxu0
        %1243 = vdwg.mxu0
        %v1244 = vld [vmem:[#allocation2] sm:$0xff]
        %v1245 = vld [vmem:[#allocation2 + $0x8] sm:$0xff]
        %v1246 = vld [vmem:[#allocation2 + $0x10] sm:$0xff]
        %v1247 = vadd.f32 %v1244, %v1198
        %v1248 = vadd.f32 %v1245, %v1200
        %v1249 = vadd.f32 %v1246, %v1239
        %1250 = vst [vmem:[#allocation2] sm:$0xff] %v1247
        %1251 = vst [vmem:[#allocation2 + $0x8] sm:$0xff] %v1248
        %1252 = vst.msk [vmem:[#allocation2 + $0x10] sm:$0xff] %vm334, %v1249
        %v1253 = vld [vmem:[%s216] sm:$0x3f]
        %s1254 = scalar_lea.vmem %s207, 32
        %v1255 = vld [vmem:[%s1254] sm:$0xf]
        %v1257 = vcombine.high %v1253, %v1253
        %v1259 = vunpack.c.l.s4 1983009808
        %v1260 = vunpack.c.0.s8 %v1259
        %v1261 = vlaneseq
        %v1262 = vshrl.u32 %v1261, 7
        %v1263 = vsub.s32 %v1260, %v1262
        %v1264 = vrot.slane %v1253, %v1263
        %v1266 = vunpack.c.l.s4 1983009808
        %v1267 = vunpack.c.0.s8 %v1266
        %v1268 = vlaneseq
        %v1269 = vshrl.u32 %v1268, 7
        %v1270 = vsub.s32 %v1267, %v1269
        %v1271 = vrot.slane %v1257, %v1270
        %v1272 = vcombine.high %v1264, %v1264
        %1273 = vrot.lane.b32.xlu0 %v1264, 90
        %v1274 = vpop.permute.xlu0 %1273
        %1275 = vrot.lane.b32.xlu0 %v1272, 90
        %v1276 = vpop.permute.xlu0 %1275
        %1277 = vrot.lane.b32.xlu0 %v1271, 90
        %v1278 = vpop.permute.xlu0 %1277
        %vm1279 = vcmask 736256
        %v1280 = vsel %vm1279, %v1274, %v1276
        %v1281 = vsel %vm1279, %v1276, %v1278
        %v1283 = vsel %vm237, %v1255, 0
        %v1286 = vsel %vm241, %v1280, 0
        %v1289 = vsel %vm241, %v1281, 0
        %v1292 = vsel %vm241, %v1278, 0
        %1294 = vmatprep.subr.bf16.mxu0 %v1289
        %1295 = vmatpush1.bf16.msra.mxu0 %v1286
        %1296 = vmatprep.subr.bf16.mxu0 0
        %1297 = vmatpush1.bf16.msra.mxu0 0
        %1298 = vmatprep.subr.bf16.mxu0 0
        %1299 = vmatpush1.bf16.msra.mxu0 0
        %1300 = vmatprep.subr.bf16.mxu0 0
        %1301 = vmatpush1.bf16.msra.mxu0 0
        %1302 = vmatprep.subr.bf16.mxu0 0
        %1303 = vmatpush1.bf16.msra.mxu0 0
        %1304 = vmatprep.subr.bf16.mxu0 0
        %1305 = vmatpush1.bf16.msra.mxu0 0
        %1306 = vmatprep.subr.bf16.mxu0 0
        %1307 = vmatpush1.bf16.msra.mxu0 0
        %1308 = vmatprep.subr.bf16.mxu0 0
        %1309 = vmatpush1.bf16.msra.mxu0 0
        %1310 = vmatprep.subr.bf16.mxu0 0
        %1311 = vmatpush1.bf16.msra.mxu0 0
        %1312 = vmatprep.subr.bf16.mxu0 0
        %1313 = vmatpush1.bf16.msra.mxu0 0
        %1314 = vmatprep.subr.bf16.mxu0 0
        %1315 = vmatpush1.bf16.msra.mxu0 0
        %1316 = vmatprep.subr.bf16.mxu0 0
        %1317 = vmatpush1.bf16.msra.mxu0 0
        %1318 = vmatprep.subr.bf16.mxu0 0
        %1319 = vmatpush1.bf16.msra.mxu0 0
        %1320 = vmatprep.subr.bf16.mxu0 0
        %1321 = vmatpush1.bf16.msra.mxu0 0
        %1322 = vmatprep.subr.bf16.mxu0 0
        %1323 = vmatpush1.bf16.msra.mxu0 0
        %1324 = vmatprep.subr.bf16.mxu0 0
        %1325 = vmatpush1.bf16.msra.mxu0 0
        %1326 = vmatprep.mubr.bf16.mxu0 0
        %1327 = vmatmul.mubr.bf16.gmra.mrb[0].mxu0 %v1283
        %v1328 = vpop.f32.mrb[0].mxu0
        %v1329 = vadd.f32 0.0, %v1328
        %v1330 = vpop.f32.mrb[0].mxu0
        %v1331 = vadd.f32 0.0, %v1330
        %v1332 = vpop.f32.mrb[0].mxu0
        %v1333 = vpop.f32.mrb[0].mxu0
        %1334 = vdwg.mxu0
        %1335 = vmatprep.subr.bf16.mxu0 0
        %1336 = vmatpush1.bf16.msra.mxu0 %v1292
        %1337 = vmatprep.subr.bf16.mxu0 0
        %1338 = vmatpush1.bf16.msra.mxu0 0
        %1339 = vmatprep.subr.bf16.mxu0 0
        %1340 = vmatpush1.bf16.msra.mxu0 0
        %1341 = vmatprep.subr.bf16.mxu0 0
        %1342 = vmatpush1.bf16.msra.mxu0 0
        %1343 = vmatprep.subr.bf16.mxu0 0
        %1344 = vmatpush1.bf16.msra.mxu0 0
        %1345 = vmatprep.subr.bf16.mxu0 0
        %1346 = vmatpush1.bf16.msra.mxu0 0
        %1347 = vmatprep.subr.bf16.mxu0 0
        %1348 = vmatpush1.bf16.msra.mxu0 0
        %1349 = vmatprep.subr.bf16.mxu0 0
        %1350 = vmatpush1.bf16.msra.mxu0 0
        %1351 = vmatprep.subr.bf16.mxu0 0
        %1352 = vmatpush1.bf16.msra.mxu0 0
        %1353 = vmatprep.subr.bf16.mxu0 0
        %1354 = vmatpush1.bf16.msra.mxu0 0
        %1355 = vmatprep.subr.bf16.mxu0 0
        %1356 = vmatpush1.bf16.msra.mxu0 0
        %1357 = vmatprep.subr.bf16.mxu0 0
        %1358 = vmatpush1.bf16.msra.mxu0 0
        %1359 = vmatprep.subr.bf16.mxu0 0
        %1360 = vmatpush1.bf16.msra.mxu0 0
        %1361 = vmatprep.subr.bf16.mxu0 0
        %1362 = vmatpush1.bf16.msra.mxu0 0
        %1363 = vmatprep.subr.bf16.mxu0 0
        %1364 = vmatpush1.bf16.msra.mxu0 0
        %1365 = vmatprep.subr.bf16.mxu0 0
        %1366 = vmatpush1.bf16.msra.mxu0 0
        %1367 = vmatprep.mubr.bf16.mxu0 0
        %1368 = vmatmul.mubr.bf16.gmra.mrb[0].mxu0 %v1283
        %v1369 = vpop.f32.mrb[0].mxu0
        %v1370 = vadd.f32 0.0, %v1369
        %v1371 = vpop.f32.mrb[0].mxu0
        %v1372 = vpop.f32.mrb[0].mxu0
        %v1373 = vpop.f32.mrb[0].mxu0
        %1374 = vdwg.mxu0
        %v1375 = vld [vmem:[#allocation2] sm:$0xff]
        %v1376 = vld [vmem:[#allocation2 + $0x8] sm:$0xff]
        %v1377 = vld [vmem:[#allocation2 + $0x10] sm:$0xff]
        %v1378 = vadd.f32 %v1375, %v1329
        %v1379 = vadd.f32 %v1376, %v1331
        %v1380 = vadd.f32 %v1377, %v1370
        %1381 = vst [vmem:[#allocation2] sm:$0xff] %v1378
        %1382 = vst [vmem:[#allocation2 + $0x8] sm:$0xff] %v1379
        %1383 = vst.msk [vmem:[#allocation2 + $0x10] sm:$0xff] %vm334, %v1380
        %v1384 = vld [vmem:[#allocation2] sm:$0xff]
        %v1385 = vld [vmem:[#allocation2 + $0x8] sm:$0xff]
        %v1386 = vld [vmem:[#allocation2 + $0x10] sm:$0xff]
        %v1387 = vld [vmem:[%s211] sm:$0xff]
        %1389 = vset.pattern.permute.xlu0 0
        %1390 = vperm.xlu0 %1389, %v1387
        %v1391 = vpop.permute.xlu0 %1390
        %v1393 = vadd.f32 %v1384, %v1391
        %v1394 = vadd.f32 %v1385, %v1391
        %v1395 = vadd.f32 %v1386, %v1391
        %v1396 = vmax.f32 %v1393, 0.0
        %v1397 = vmax.f32 %v1394, 0.0
        %v1398 = vmax.f32 %v1395, 0.0
        %v1399 = vpack.c.bf16 %v1396, %v1396
        %v1400 = vpack.c.bf16 %v1397, %v1397
        %v1401 = vpack.c.bf16 %v1398, %v1398
        %v1405 = vunpack.c.l.b16 %v1399
        %v1406 = vunpack.c.l.b16 %v1400
        %v1407 = vunpack.c.l.b16 %v1401
        %v1408 = vpack.c.b16 %v1406, %v1405
        %v1409 = vpack.c.b16 %v1407, %v1407
        %1412 = vst [vmem:[%s203] sm:$0xff] %v1408
        %vm1413 = vcmask 257024
        %1414 = vst.msk [vmem:[%s203 + $0x8] sm:$0xf] %vm1413, %v1409
        %s1415 = sand.u32 %s117, 1
        %s1416 = scalar_lea.sflag [#allocation4], %s1415
        %s1417 = sand.u32 %s117, 1
        %s1418 = smul.addr %s1417, 12
        %s1419 = scalar_lea.vmem [#allocation3], %s1418
        // Predicated region
        $region33: #{tpu_custom_call.1} parent=31 // pred_check
          %p1420 = pneg %p127
        $region34: #{tpu_custom_call.1} parent=31 // pred_check_branch
          %1422 = sbr.rel (%p1420) target = $region36
        $region35: #{tpu_custom_call.1} parent=31 // pred_region
          %s1424 = ssub.s32 192, 192
          %1425 = vsyncadd %s1416, %s1424
          %s1426 = smul.addr %s22, 3
          %s1427 = smul.addr %s21, 3
          %s1428 = sadd.s32 %s1426, %s1427
          %s1429 = smul.addr %s1428, 64
          %s1430 = scalar_lea.hbm %s3, %s1429
          %s1432 = sshll.u32 %s1419, 4
          %s1433 = int_to_ptr.vmem [resolvable:$true] %s1432
          %1435 = dma.vmem_to_hbm [thread:$0]  %s1433, 192, %s1430, %s1416
        $region36: #{tpu_custom_call.1} parent=31 // pred_fallthru
          _
      $region32: #{tpu_custom_call.1} parent=5 // pred_fallthru
        _
      %p1436 = scmp.le.s32.totalorder 2, %s12
      // Predicated region
      $region37: #{tpu_custom_call.1} parent=5 // pred_check
        %p1437 = pneg %p1436
      $region38: #{tpu_custom_call.1} parent=5 // pred_check_branch
        %1439 = sbr.rel (%p1437) target = $region40
      $region39: #{tpu_custom_call.1} parent=5 // pred_region
        %s1440 = ssub.s32 %s12, 2
        // Predicated region
        $region41: #{tpu_custom_call.1} parent=39 // pred_check
          %p1441 = pneg %p133
        $region42: #{tpu_custom_call.1} parent=39 // pred_check_branch
          %1443 = sbr.rel (%p1441) target = $region44
        $region43: #{tpu_custom_call.1} parent=39 // pred_region
          %s1444 = sand.u32 %s118, 1
          %s1445 = scalar_lea.sflag [#allocation4], %s1444
          %s1446 = sand.u32 %s118, 1
          %s1447 = smul.addr %s1446, 12
          %s1448 = scalar_lea.vmem [#allocation3], %s1447
          %1449 = dma.done %s1445, 192
        $region44: #{tpu_custom_call.1} parent=39 // pred_fallthru
          _
      $region40: #{tpu_custom_call.1} parent=5 // pred_fallthru
        _
    $region6: #{tpu_custom_call.1} parent=1 // loop_footer
      %s16 = sadd.s32 1, %s12
    $region7: #{tpu_custom_call.1} parent=1 // loop_footer_branch
      %11 = sbr.rel target = $region3
    $region8: #{tpu_custom_call.1} parent=1 // loop_exit
      _
    %1450 = vsyncpa [#allocation4], 1
    %s1451 = scalar_lea.sflag [#allocation4], 1
    %1452 = vsyncpa %s1451, 1

</llo_original>
